<compile_context>
chip_gen: v6e
topology: v6e:2x2x1
jax: 0.10.0
libtpu: 0.0.40
codegen_flags: <defaults>
</compile_context>

<pallas_src>
import numpy as np
import jax
import jax.numpy as jnp
from jax.experimental import pallas as pl
from jax.experimental.pallas import tpu as pltpu


def _dual_attention_kernel(f1_ref, f2_ref, w1a_ref, w1b_ref, b1_ref, w2_ref,
                           b2_ref, alpha1_ref, alpha2_ref, sum1_ref, sum2_ref,
                           acc1_ref, acc2_ref):
    """Fused dual-attention for one (batch, HW-tile) grid point.

    f1_ref/f2_ref : (1, T, C)   feature tiles (channel-last)
    w1a_ref       : (C, A)      conv1 weight rows multiplying the feature
    w1b_ref       : (C, A)      conv1 weight rows multiplying the diff
    b1_ref        : (1, A)
    w2_ref        : (1, A)      conv2 weight (row form)
    b2_ref        : (1,)        conv2 bias (SMEM scalar)
    alpha1/2_ref  : (1, 1, T)   lane-dense attention maps (output)
    sum1/2_ref    : (1, 1, C)   spatial sums (output, resident over HW tiles)
    acc1/2_ref    : (1, C)      f32 VMEM accumulators (scratch)
    """
    t = pl.program_id(1)

    @pl.when(t == 0)
    def _init():
        acc1_ref[...] = jnp.zeros_like(acc1_ref)
        acc2_ref[...] = jnp.zeros_like(acc2_ref)

    f1 = f1_ref[0]                      # [T, C]
    f2 = f2_ref[0]                      # [T, C]
    diff = f2 - f1                      # computed once, never hits HBM

    w1a = w1a_ref[...]
    w1b = w1b_ref[...]
    b1 = b1_ref[...]                    # [1, A], broadcasts over sublanes

    # conv1 (1x1) with the concat decomposed; diff projection shared.
    d_proj = jnp.dot(diff, w1b, preferred_element_type=jnp.float32)   # [T, A]
    h1 = jnp.maximum(
        jnp.dot(f1, w1a, preferred_element_type=jnp.float32) + d_proj + b1, 0.0)
    h2 = jnp.maximum(
        jnp.dot(f2, w1a, preferred_element_type=jnp.float32) + d_proj + b1, 0.0)

    # conv2 (1x1) + sigmoid as an NT matmul -> lane-dense [1, T] alpha.
    w2 = w2_ref[...]                    # [1, A]
    b2 = b2_ref[0]                      # scalar from SMEM
    nt_dims = (((1,), (1,)), ((), ()))  # contract the A axis of both operands
    logit1 = jax.lax.dot_general(w2, h1, nt_dims,
                                 preferred_element_type=jnp.float32) + b2
    logit2 = jax.lax.dot_general(w2, h2, nt_dims,
                                 preferred_element_type=jnp.float32) + b2
    alpha1 = jax.nn.sigmoid(logit1)     # [1, T]
    alpha2 = jax.nn.sigmoid(logit2)

    alpha1_ref[0] = alpha1.astype(alpha1_ref.dtype)
    alpha2_ref[0] = alpha2.astype(alpha2_ref.dtype)

    # attend + spatial sum as an MXU contraction over the HW tile.
    acc1_ref[...] += jnp.dot(alpha1.astype(f1.dtype), f1,
                             preferred_element_type=jnp.float32)       # [1, C]
    acc2_ref[...] += jnp.dot(alpha2.astype(f2.dtype), f2,
                             preferred_element_type=jnp.float32)

    @pl.when(t == pl.num_programs(1) - 1)
    def _finalize():
        sum1_ref[0] = acc1_ref[...].astype(sum1_ref.dtype)
        sum2_ref[0] = acc2_ref[...].astype(sum2_ref.dtype)


def _choose_hw_tile(hw, c, itemsize, max_hw_tile):
    """Largest multiple-of-128 divisor of HW (capped) whose double-buffered
    f1+f2 blocks stay under a conservative VMEM budget (safe on v7x 64 MiB)."""
    if hw % 128 != 0:
        return hw                       # single full block is still legal
    budget = 16 * 1024 * 1024           # 2 inputs x 2 buffers x T x C x itemsize
    best = 128
    t = 128
    while t <= min(hw, max_hw_tile):
        if hw % t == 0 and 4 * t * c * itemsize <= budget:
            best = t
        t += 128
    return best


def dual_attention(img_feat1, img_feat2, w1, b1, w2, b2, *,
                   max_hw_tile=512, compute_dtype=None):
    """img_feat1/2: NHWC [B, H, W, C].

    w1: [2C, A] (conv1, matmul form), b1: [A], w2: [A, 1] or [A], b2: scalar.
    Returns (feat1_sum [B,C], feat2_sum [B,C], alpha1 [B,1,H,W], alpha2 [B,1,H,W]).
    """
    B, H, W, C = img_feat1.shape
    HW = H * W
    two_c, A = w1.shape
    assert two_c == 2 * C, "conv1 expects 2*feature_dim input channels"

    f1 = img_feat1.reshape(B, HW, C)
    f2 = img_feat2.reshape(B, HW, C)

    # Split conv1 weight so concat([feat, diff]) never materializes in HBM.
    w1a = jnp.asarray(w1[:C], jnp.float32)
    w1b = jnp.asarray(w1[C:], jnp.float32)

    # Pad attention dim to a multiple of 128 (full MXU lane tile).  Zero
    # columns produce exact zeros through ReLU and conv2 -> no numeric change.
    A_pad = ((A + 127) // 128) * 128
    pad = A_pad - A
    w1a = jnp.pad(w1a, ((0, 0), (0, pad)))
    w1b = jnp.pad(w1b, ((0, 0), (0, pad)))
    b1_row = jnp.pad(jnp.asarray(b1, jnp.float32).reshape(1, A), ((0, 0), (0, pad)))
    w2_row = jnp.pad(jnp.asarray(w2, jnp.float32).reshape(1, A), ((0, 0), (0, pad)))
    b2_s = jnp.asarray(b2, jnp.float32).reshape(1)

    if compute_dtype is not None:                 # e.g. bf16 on v6e / v7x
        f1 = f1.astype(compute_dtype)
        f2 = f2.astype(compute_dtype)
        w1a = w1a.astype(compute_dtype)
        w1b = w1b.astype(compute_dtype)

    itemsize = jnp.dtype(f1.dtype).itemsize
    T = _choose_hw_tile(HW, C, itemsize, max_hw_tile)
    n_t = HW // T

    # VMEM estimate (double-buffered feature blocks dominate) -> scoped limit.
    est = (2 * 2 * T * C * itemsize            # f1/f2 blocks, double-buffered
           + 2 * 2 * C * A_pad * 4             # conv1 weights
           + 4 * C * 4 + 4 * T * 4)            # sums/accs + alpha blocks
    cp_kwargs = dict(dimension_semantics=("parallel", "arbitrary"))
    if est > 12 * 1024 * 1024:
        cp_kwargs["vmem_limit_bytes"] = int(min(2 * est, 48 * 1024 * 1024))

    grid_spec = pltpu.PrefetchScalarGridSpec(
        num_scalar_prefetch=0,
        grid=(B, n_t),
        in_specs=[
            pl.BlockSpec((1, T, C), lambda b, t: (b, t, 0)),       # f1
            pl.BlockSpec((1, T, C), lambda b, t: (b, t, 0)),       # f2
            pl.BlockSpec((C, A_pad), lambda b, t: (0, 0)),         # w1a
            pl.BlockSpec((C, A_pad), lambda b, t: (0, 0)),         # w1b
            pl.BlockSpec((1, A_pad), lambda b, t: (0, 0)),         # b1
            pl.BlockSpec((1, A_pad), lambda b, t: (0, 0)),         # w2 row
            pl.BlockSpec(memory_space=pltpu.MemorySpace.SMEM),     # b2 scalar
        ],
        out_specs=[
            pl.BlockSpec((1, 1, T), lambda b, t: (b, 0, t)),       # alpha1 (lane-dense)
            pl.BlockSpec((1, 1, T), lambda b, t: (b, 0, t)),       # alpha2
            pl.BlockSpec((1, 1, C), lambda b, t: (b, 0, 0)),       # sum1 (resident over t)
            pl.BlockSpec((1, 1, C), lambda b, t: (b, 0, 0)),       # sum2
        ],
        scratch_shapes=[
            pltpu.VMEM((1, C), jnp.float32),                       # acc1
            pltpu.VMEM((1, C), jnp.float32),                       # acc2
        ],
    )

    alpha1, alpha2, sum1, sum2 = pl.pallas_call(
        _dual_attention_kernel,
        out_shape=(
            jax.ShapeDtypeStruct((B, 1, HW), jnp.float32),
            jax.ShapeDtypeStruct((B, 1, HW), jnp.float32),
            jax.ShapeDtypeStruct((B, 1, C), jnp.float32),
            jax.ShapeDtypeStruct((B, 1, C), jnp.float32),
        ),
        grid_spec=grid_spec,
        compiler_params=pltpu.CompilerParams(**cp_kwargs),
    )(f1, f2, w1a, w1b, b1_row, w2_row, b2_s)

    # [B, 1, HW] -> NCHW [B, 1, H, W] is a contiguous reshape (no transpose).
    alpha1 = alpha1.reshape(B, 1, H, W)
    alpha2 = alpha2.reshape(B, 1, H, W)
    return sum1.reshape(B, C), sum2.reshape(B, C), alpha1, alpha2


def _reference(img_feat1, img_feat2, w1, b1, w2, b2):
    """Pure-JAX reference mirroring the PyTorch forward."""
    B, H, W, C = img_feat1.shape
    f1 = img_feat1.reshape(B, -1, C)
    f2 = img_feat2.reshape(B, -1, C)
    diff = f2 - f1

    def branch(feat, xcat):
        h = jnp.maximum(xcat @ w1 + b1, 0.0)
        alpha = jax.nn.sigmoid(h @ w2 + b2)          # [B, HW, 1]
        s = jnp.sum(feat * alpha, axis=1)            # [B, C]
        return s, alpha

    s1, a1 = branch(f1, jnp.concatenate([f1, diff], -1))
    s2, a2 = branch(f2, jnp.concatenate([f2, diff], -1))
    a1 = a1.reshape(B, H, W, 1).transpose(0, 3, 1, 2)
    a2 = a2.reshape(B, H, W, 1).transpose(0, 3, 1, 2)
    return s1, s2, a1, a2


if __name__ == "__main__":
    B, H, W = 2, 16, 16
    feature_dim = 128     # stands in for 2048 in the real model
    attention_dim = 8

    key = jax.random.PRNGKey(0)
    k1, k2, k3, k4, k5, k6 = jax.random.split(key, 6)

    img_feat1 = jax.random.normal(k1, (B, H, W, feature_dim), dtype=jnp.float32)
    img_feat2 = jax.random.normal(k2, (B, H, W, feature_dim), dtype=jnp.float32)

    # conv1: [A, 2C, 1, 1] -> matmul weight [2C, A]
    w1 = jax.random.normal(k3, (2 * feature_dim, attention_dim), dtype=jnp.float32) * 0.1
    b1 = jax.random.normal(k4, (attention_dim,), dtype=jnp.float32) * 0.1
    # conv2: [1, A, 1, 1] -> matmul weight [A, 1]
    w2 = jax.random.normal(k5, (attention_dim, 1), dtype=jnp.float32) * 0.1
    b2 = jax.random.normal(k6, (), dtype=jnp.float32) * 0.1

    # max_hw_tile=128 forces 2 HW tiles -> exercises the accumulation path.
    out = dual_attention(img_feat1, img_feat2, w1, b1, w2, b2, max_hw_tile=128)
    out = jax.block_until_ready(out)

    ref = _reference(img_feat1, img_feat2, w1, b1, w2, b2)
    for got, want in zip(out, ref):
        np.testing.assert_allclose(np.asarray(got), np.asarray(want),
                                   rtol=1e-4, atol=1e-4)

    print("KERNEL_OK")
</pallas_src>

<mosaic_0001>
module attributes {stable_mosaic.version = 11 : i64} {
  func.func @_dual_attention_kernel(%arg0: i32, %arg1: i32, %arg2: memref<1x128x128xf32, #tpu.memory_space<vmem>>, %arg3: memref<1x128x128xf32, #tpu.memory_space<vmem>>, %arg4: memref<128x128xf32, #tpu.memory_space<vmem>>, %arg5: memref<128x128xf32, #tpu.memory_space<vmem>>, %arg6: memref<1x128xf32, #tpu.memory_space<vmem>>, %arg7: memref<1x128xf32, #tpu.memory_space<vmem>>, %arg8: memref<1xf32, #tpu.memory_space<smem>>, %arg9: memref<1x1x128xf32, #tpu.memory_space<vmem>>, %arg10: memref<1x1x128xf32, #tpu.memory_space<vmem>>, %arg11: memref<1x1x128xf32, #tpu.memory_space<vmem>>, %arg12: memref<1x1x128xf32, #tpu.memory_space<vmem>>, %arg13: memref<1x128xf32, #tpu.memory_space<vmem>>, %arg14: memref<1x128xf32, #tpu.memory_space<vmem>>) attributes {dimension_semantics = [#tpu.dimension_semantics<parallel>, #tpu.dimension_semantics<arbitrary>], iteration_bounds = array<i64: 2, 2>, scalar_prefetch = 0 : i64, scratch_operands = 2 : i64, tpu.core_type = #tpu.core_type<tc>, window_params = [{transform_indices = @transform_0, window_bounds = array<i64: 1, 128, 128>}, {transform_indices = @transform_1, window_bounds = array<i64: 1, 128, 128>}, {pipeline_mode = #tpu.pipeline_mode<synchronous>, transform_indices = @transform_2, window_bounds = array<i64: 128, 128>}, {pipeline_mode = #tpu.pipeline_mode<synchronous>, transform_indices = @transform_3, window_bounds = array<i64: 128, 128>}, {pipeline_mode = #tpu.pipeline_mode<synchronous>, transform_indices = @transform_4, window_bounds = array<i64: 1, 128>}, {pipeline_mode = #tpu.pipeline_mode<synchronous>, transform_indices = @transform_5, window_bounds = array<i64: 1, 128>}, {transform_indices = @transform_6, window_bounds = array<i64: 1>}, {transform_indices = @transform_7, window_bounds = array<i64: 1, 1, 128>}, {transform_indices = @transform_8, window_bounds = array<i64: 1, 1, 128>}, {transform_indices = @transform_9, window_bounds = array<i64: 1, 1, 128>}, {transform_indices = @transform_10, window_bounds = array<i64: 1, 1, 128>}]} {
    %c0_i32 = arith.constant 0 : i32
    %0 = arith.cmpi eq, %arg1, %c0_i32 : i32
    %1 = arith.extui %0 : i1 to i32
    %c0_i32_0 = arith.constant 0 : i32
    %2 = arith.cmpi ne, %1, %c0_i32_0 : i32
    scf.if %2 {
      %cst_40 = arith.constant 0.000000e+00 : f32
      %59 = vector.broadcast %cst_40 : f32 to vector<1x128xf32>
      %c0_41 = arith.constant 0 : index
      %c0_42 = arith.constant 0 : index
      %60 = vector.load %arg13[%c0_41, %c0_42] : memref<1x128xf32, #tpu.memory_space<vmem>>, vector<1x128xf32>
      tpu.vector_store %arg13[%c0_41, %c0_42], %59 {strides = array<i32>} : memref<1x128xf32, #tpu.memory_space<vmem>>, vector<1x128xf32>,
      %cst_43 = arith.constant 0.000000e+00 : f32
      %61 = vector.broadcast %cst_43 : f32 to vector<1x128xf32>
      %c0_44 = arith.constant 0 : index
      %c0_45 = arith.constant 0 : index
      %62 = vector.load %arg14[%c0_44, %c0_45] : memref<1x128xf32, #tpu.memory_space<vmem>>, vector<1x128xf32>
      tpu.vector_store %arg14[%c0_44, %c0_45], %61 {strides = array<i32>} : memref<1x128xf32, #tpu.memory_space<vmem>>, vector<1x128xf32>,
    } else {
    }
    %c0 = arith.constant 0 : index
    %c0_1 = arith.constant 0 : index
    %c0_2 = arith.constant 0 : index
    %3 = vector.load %arg2[%c0, %c0_1, %c0_2] : memref<1x128x128xf32, #tpu.memory_space<vmem>>, vector<1x128x128xf32>
    %4 = vector.shape_cast %3 : vector<1x128x128xf32> to vector<128x128xf32>
    %c0_3 = arith.constant 0 : index
    %c0_4 = arith.constant 0 : index
    %c0_5 = arith.constant 0 : index
    %5 = vector.load %arg3[%c0_3, %c0_4, %c0_5] : memref<1x128x128xf32, #tpu.memory_space<vmem>>, vector<1x128x128xf32>
    %6 = vector.shape_cast %5 : vector<1x128x128xf32> to vector<128x128xf32>
    %7 = arith.subf %6, %4 : vector<128x128xf32>
    %c0_6 = arith.constant 0 : index
    %c0_7 = arith.constant 0 : index
    %8 = vector.load %arg4[%c0_6, %c0_7] : memref<128x128xf32, #tpu.memory_space<vmem>>, vector<128x128xf32>
    %c0_8 = arith.constant 0 : index
    %c0_9 = arith.constant 0 : index
    %9 = vector.load %arg5[%c0_8, %c0_9] : memref<128x128xf32, #tpu.memory_space<vmem>>, vector<128x128xf32>
    %c0_10 = arith.constant 0 : index
    %c0_11 = arith.constant 0 : index
    %10 = vector.load %arg6[%c0_10, %c0_11] : memref<1x128xf32, #tpu.memory_space<vmem>>, vector<1x128xf32>
    %cst = arith.constant dense<0.000000e+00> : vector<128x128xf32>
    %11 = tpu.matmul %7, %9, %cst {dimension_numbers = #tpu.dot_dimension_numbers<[1], [0], [0], [1], [0, 0, 1, 1], [], []>} : vector<128x128xf32>, vector<128x128xf32>, vector<128x128xf32> -> vector<128x128xf32>
    %cst_12 = arith.constant dense<0.000000e+00> : vector<128x128xf32>
    %12 = tpu.matmul %4, %8, %cst_12 {dimension_numbers = #tpu.dot_dimension_numbers<[1], [0], [0], [1], [0, 0, 1, 1], [], []>} : vector<128x128xf32>, vector<128x128xf32>, vector<128x128xf32> -> vector<128x128xf32>
    %13 = arith.addf %12, %11 : vector<128x128xf32>
    %14 = vector.broadcast %10 : vector<1x128xf32> to vector<128x128xf32>
    %15 = arith.addf %13, %14 : vector<128x128xf32>
    %cst_13 = arith.constant 0.000000e+00 : f32
    %16 = vector.broadcast %cst_13 : f32 to vector<128x128xf32>
    %17 = arith.maximumf %15, %16 : vector<128x128xf32>
    %cst_14 = arith.constant dense<0.000000e+00> : vector<128x128xf32>
    %18 = tpu.matmul %6, %8, %cst_14 {dimension_numbers = #tpu.dot_dimension_numbers<[1], [0], [0], [1], [0, 0, 1, 1], [], []>} : vector<128x128xf32>, vector<128x128xf32>, vector<128x128xf32> -> vector<128x128xf32>
    %19 = arith.addf %18, %11 : vector<128x128xf32>
    %20 = vector.broadcast %10 : vector<1x128xf32> to vector<128x128xf32>
    %21 = arith.addf %19, %20 : vector<128x128xf32>
    %cst_15 = arith.constant 0.000000e+00 : f32
    %22 = vector.broadcast %cst_15 : f32 to vector<128x128xf32>
    %23 = arith.maximumf %21, %22 : vector<128x128xf32>
    %c0_16 = arith.constant 0 : index
    %c0_17 = arith.constant 0 : index
    %24 = vector.load %arg7[%c0_16, %c0_17] : memref<1x128xf32, #tpu.memory_space<vmem>>, vector<1x128xf32>
    %c0_18 = arith.constant 0 : index
    %25 = memref.load %arg8[%c0_18] : memref<1xf32, #tpu.memory_space<smem>>
    %cst_19 = arith.constant dense<0.000000e+00> : vector<1x128xf32>
    %26 = tpu.matmul %24, %17, %cst_19 {dimension_numbers = #tpu.dot_dimension_numbers<[1], [1], [0], [0], [0, 0, 1, 0], [], []>} : vector<1x128xf32>, vector<128x128xf32>, vector<1x128xf32> -> vector<1x128xf32>
    %27 = vector.broadcast %25 : f32 to vector<1x128xf32>
    %28 = arith.addf %26, %27 : vector<1x128xf32>
    %cst_20 = arith.constant dense<0.000000e+00> : vector<1x128xf32>
    %29 = tpu.matmul %24, %23, %cst_20 {dimension_numbers = #tpu.dot_dimension_numbers<[1], [1], [0], [0], [0, 0, 1, 0], [], []>} : vector<1x128xf32>, vector<128x128xf32>, vector<1x128xf32> -> vector<1x128xf32>
    %30 = vector.broadcast %25 : f32 to vector<1x128xf32>
    %31 = arith.addf %29, %30 : vector<1x128xf32>
    %32 = arith.negf %28 : vector<1x128xf32>
    %33 = math.exp %32 : vector<1x128xf32>
    %cst_21 = arith.constant 1.000000e+00 : f32
    %34 = vector.broadcast %cst_21 : f32 to vector<1x128xf32>
    %35 = arith.addf %34, %33 : vector<1x128xf32>
    %36 = arith.divf %34, %35 : vector<1x128xf32>
    %37 = arith.negf %31 : vector<1x128xf32>
    %38 = math.exp %37 : vector<1x128xf32>
    %cst_22 = arith.constant 1.000000e+00 : f32
    %39 = vector.broadcast %cst_22 : f32 to vector<1x128xf32>
    %40 = arith.addf %39, %38 : vector<1x128xf32>
    %41 = arith.divf %39, %40 : vector<1x128xf32>
    %c0_23 = arith.constant 0 : index
    %c0_24 = arith.constant 0 : index
    %c0_25 = arith.constant 0 : index
    %42 = vector.load %arg9[%c0_23, %c0_24, %c0_25] : memref<1x1x128xf32, #tpu.memory_space<vmem>>, vector<1x1x128xf32>
    %43 = vector.shape_cast %42 : vector<1x1x128xf32> to vector<1x128xf32>
    %44 = vector.shape_cast %36 : vector<1x128xf32> to vector<1x1x128xf32>
    tpu.vector_store %arg9[%c0_23, %c0_24, %c0_25], %44 {strides = array<i32>} : memref<1x1x128xf32, #tpu.memory_space<vmem>>, vector<1x1x128xf32>,
    %c0_26 = arith.constant 0 : index
    %c0_27 = arith.constant 0 : index
    %c0_28 = arith.constant 0 : index
    %45 = vector.load %arg10[%c0_26, %c0_27, %c0_28] : memref<1x1x128xf32, #tpu.memory_space<vmem>>, vector<1x1x128xf32>
    %46 = vector.shape_cast %45 : vector<1x1x128xf32> to vector<1x128xf32>
    %47 = vector.shape_cast %41 : vector<1x128xf32> to vector<1x1x128xf32>
    tpu.vector_store %arg10[%c0_26, %c0_27, %c0_28], %47 {strides = array<i32>} : memref<1x1x128xf32, #tpu.memory_space<vmem>>, vector<1x1x128xf32>,
    %c0_29 = arith.constant 0 : index
    %c0_30 = arith.constant 0 : index
    %48 = vector.load %arg13[%c0_29, %c0_30] : memref<1x128xf32, #tpu.memory_space<vmem>>, vector<1x128xf32>
    %cst_31 = arith.constant dense<0.000000e+00> : vector<1x128xf32>
    %49 = tpu.matmul %36, %4, %cst_31 {dimension_numbers = #tpu.dot_dimension_numbers<[1], [0], [0], [1], [0, 0, 1, 1], [], []>} : vector<1x128xf32>, vector<128x128xf32>, vector<1x128xf32> -> vector<1x128xf32>
    %50 = arith.addf %48, %49 : vector<1x128xf32>
    %c0_32 = arith.constant 0 : index
    %c0_33 = arith.constant 0 : index
    %51 = vector.load %arg13[%c0_32, %c0_33] : memref<1x128xf32, #tpu.memory_space<vmem>>, vector<1x128xf32>
    tpu.vector_store %arg13[%c0_32, %c0_33], %50 {strides = array<i32>} : memref<1x128xf32, #tpu.memory_space<vmem>>, vector<1x128xf32>,
    %c0_34 = arith.constant 0 : index
    %c0_35 = arith.constant 0 : index
    %52 = vector.load %arg14[%c0_34, %c0_35] : memref<1x128xf32, #tpu.memory_space<vmem>>, vector<1x128xf32>
    %cst_36 = arith.constant dense<0.000000e+00> : vector<1x128xf32>
    %53 = tpu.matmul %41, %6, %cst_36 {dimension_numbers = #tpu.dot_dimension_numbers<[1], [0], [0], [1], [0, 0, 1, 1], [], []>} : vector<1x128xf32>, vector<128x128xf32>, vector<1x128xf32> -> vector<1x128xf32>
    %54 = arith.addf %52, %53 : vector<1x128xf32>
    %c0_37 = arith.constant 0 : index
    %c0_38 = arith.constant 0 : index
    %55 = vector.load %arg14[%c0_37, %c0_38] : memref<1x128xf32, #tpu.memory_space<vmem>>, vector<1x128xf32>
    tpu.vector_store %arg14[%c0_37, %c0_38], %54 {strides = array<i32>} : memref<1x128xf32, #tpu.memory_space<vmem>>, vector<1x128xf32>,
    %c1_i32 = arith.constant 1 : i32
    %56 = arith.cmpi eq, %arg1, %c1_i32 : i32
    %57 = arith.extui %56 : i1 to i32
    %c0_i32_39 = arith.constant 0 : i32
    %58 = arith.cmpi ne, %57, %c0_i32_39 : i32
    scf.if %58 {
      %c0_40 = arith.constant 0 : index
      %c0_41 = arith.constant 0 : index
      %59 = vector.load %arg13[%c0_40, %c0_41] : memref<1x128xf32, #tpu.memory_space<vmem>>, vector<1x128xf32>
      %c0_42 = arith.constant 0 : index
      %c0_43 = arith.constant 0 : index
      %c0_44 = arith.constant 0 : index
      %60 = vector.load %arg11[%c0_42, %c0_43, %c0_44] : memref<1x1x128xf32, #tpu.memory_space<vmem>>, vector<1x1x128xf32>
      %61 = vector.shape_cast %60 : vector<1x1x128xf32> to vector<1x128xf32>
      %62 = vector.shape_cast %59 : vector<1x128xf32> to vector<1x1x128xf32>
      tpu.vector_store %arg11[%c0_42, %c0_43, %c0_44], %62 {strides = array<i32>} : memref<1x1x128xf32, #tpu.memory_space<vmem>>, vector<1x1x128xf32>,
      %c0_45 = arith.constant 0 : index
      %c0_46 = arith.constant 0 : index
      %63 = vector.load %arg14[%c0_45, %c0_46] : memref<1x128xf32, #tpu.memory_space<vmem>>, vector<1x128xf32>
      %c0_47 = arith.constant 0 : index
      %c0_48 = arith.constant 0 : index
      %c0_49 = arith.constant 0 : index
      %64 = vector.load %arg12[%c0_47, %c0_48, %c0_49] : memref<1x1x128xf32, #tpu.memory_space<vmem>>, vector<1x1x128xf32>
      %65 = vector.shape_cast %64 : vector<1x1x128xf32> to vector<1x128xf32>
      %66 = vector.shape_cast %63 : vector<1x128xf32> to vector<1x1x128xf32>
      tpu.vector_store %arg12[%c0_47, %c0_48, %c0_49], %66 {strides = array<i32>} : memref<1x1x128xf32, #tpu.memory_space<vmem>>, vector<1x1x128xf32>,
    } else {
    }
    return
  }
  func.func @transform_0(%arg0: i32, %arg1: i32) -> (i32, i32, i32) {
    %c0_i32 = arith.constant 0 : i32
    %c0_i32_0 = arith.constant 0 : i32
    return %arg0, %arg1, %c0_i32 : i32, i32, i32
  }
  func.func @transform_1(%arg0: i32, %arg1: i32) -> (i32, i32, i32) {
    %c0_i32 = arith.constant 0 : i32
    %c0_i32_0 = arith.constant 0 : i32
    return %arg0, %arg1, %c0_i32 : i32, i32, i32
  }
  func.func @transform_2(%arg0: i32, %arg1: i32) -> (i32, i32) {
    %c0_i32 = arith.constant 0 : i32
    %c0_i32_0 = arith.constant 0 : i32
    %c0_i32_1 = arith.constant 0 : i32
    return %c0_i32, %c0_i32_0 : i32, i32
  }
  func.func @transform_3(%arg0: i32, %arg1: i32) -> (i32, i32) {
    %c0_i32 = arith.constant 0 : i32
    %c0_i32_0 = arith.constant 0 : i32
    %c0_i32_1 = arith.constant 0 : i32
    return %c0_i32, %c0_i32_0 : i32, i32
  }
  func.func @transform_4(%arg0: i32, %arg1: i32) -> (i32, i32) {
    %c0_i32 = arith.constant 0 : i32
    %c0_i32_0 = arith.constant 0 : i32
    %c0_i32_1 = arith.constant 0 : i32
    return %c0_i32, %c0_i32_0 : i32, i32
  }
  func.func @transform_5(%arg0: i32, %arg1: i32) -> (i32, i32) {
    %c0_i32 = arith.constant 0 : i32
    %c0_i32_0 = arith.constant 0 : i32
    %c0_i32_1 = arith.constant 0 : i32
    return %c0_i32, %c0_i32_0 : i32, i32
  }
  func.func @transform_6(%arg0: i32, %arg1: i32) -> i32 {
    %c0_i32 = arith.constant 0 : i32
    %c0_i32_0 = arith.constant 0 : i32
    return %c0_i32 : i32
  }
  func.func @transform_7(%arg0: i32, %arg1: i32) -> (i32, i32, i32) {
    %c0_i32 = arith.constant 0 : i32
    %c0_i32_0 = arith.constant 0 : i32
    return %arg0, %c0_i32, %arg1 : i32, i32, i32
  }
  func.func @transform_8(%arg0: i32, %arg1: i32) -> (i32, i32, i32) {
    %c0_i32 = arith.constant 0 : i32
    %c0_i32_0 = arith.constant 0 : i32
    return %arg0, %c0_i32, %arg1 : i32, i32, i32
  }
  func.func @transform_9(%arg0: i32, %arg1: i32) -> (i32, i32, i32) {
    %c0_i32 = arith.constant 0 : i32
    %c0_i32_0 = arith.constant 0 : i32
    %c0_i32_1 = arith.constant 0 : i32
    return %arg0, %c0_i32, %c0_i32_0 : i32, i32, i32
  }
  func.func @transform_10(%arg0: i32, %arg1: i32) -> (i32, i32, i32) {
    %c0_i32 = arith.constant 0 : i32
    %c0_i32_0 = arith.constant 0 : i32
    %c0_i32_1 = arith.constant 0 : i32
    return %arg0, %c0_i32, %c0_i32_0 : i32, i32, i32
  }
}

</mosaic_0001>

<llo_original>
// kernel: tpu_custom_call.1
$region0: #{tpu_custom_call.1}
  #allocation0 [shape = 'u32[]', space=smem, size = 0x4, offset = 0x4, fixed_abs, tag = 'smem constant byte address 0x4 - core index']
  #allocation1 [shape = 'u32[144,128]{1,0:T(1,128)}', space=vmem, size = 0x12000, scoped, tag = 'internal scratch']
  #allocation2 [shape = 'f32[1,128]{1,0:T(1,128)}', space=vmem, size = 0x200, scoped, tag = 'scratch operand']
  #allocation3 [shape = 'f32[1,128]{1,0:T(1,128)}', space=vmem, size = 0x200, scoped, tag = 'scratch operand']
  #allocation4 [shape = 'f32[1]{0:T(128)S(6)}', space=smem, size = 0x200, scoped, tag = 'scoped memory for tpu_custom_call.1']
  %s0 = inlined_call_operand.hbm [shape: f32[2,256,128], index: 0, kind: input, shape index: {}]
  %s1 = inlined_call_operand.hbm [shape: f32[2,256,128], index: 1, kind: input, shape index: {}]
  %s2 = inlined_call_operand.hbm [shape: f32[128,128], index: 2, kind: input, shape index: {}]
  %s3 = inlined_call_operand.hbm [shape: f32[128,128], index: 3, kind: input, shape index: {}]
  %s4 = inlined_call_operand.vmem [shape: f32[1,128], index: 4, kind: input, shape index: {}]
  %s5 = inlined_call_operand.vmem [shape: f32[1,128], index: 5, kind: input, shape index: {}]
  %s6 = inlined_call_operand.<no memory space> [shape: f32[1], index: 6, kind: input, shape index: {}]
  %s7 = inlined_call_operand.hbm [shape: f32[2,1,256], index: 7, kind: output, shape index: {0}]
  %s8 = inlined_call_operand.hbm [shape: f32[2,1,256], index: 8, kind: output, shape index: {1}]
  %s9 = inlined_call_operand.hbm [shape: f32[2,1,128], index: 9, kind: output, shape index: {2}]
  %s10 = inlined_call_operand.hbm [shape: f32[2,1,128], index: 10, kind: output, shape index: {3}]
  %11 = xla_tuple %s7, %s8, %s9, %s10
  %s12 = sld [smem:[#allocation0]]
  $region109: #{tpu_custom_call.1} parent=0
    _
  %s14 = ssub.s32 1, %s12
  %s15 = scalar_select 0, %s14, %s12
  %16 = sst [smem:[#allocation4]] %s6
  $region1: #{tpu_custom_call.1} parent=0
    #allocation5 [shape = 'u8[131072]{0}', space=vmem, size = 0x20000, scoped, tag = 'input window, operand 0']
    #allocation6 [shape = 's32[2]{0}', space=sflag, size = 0x8, scoped, tag = 'scoped memory for tpu_custom_call.1']
    #allocation7 [shape = 's32[2]{0}', space=sflag, size = 0x8, scoped, tag = 'scoped memory for tpu_custom_call.1']
    #allocation8 [shape = 'u8[131072]{0}', space=vmem, size = 0x20000, scoped, tag = 'input window, operand 1']
    #allocation9 [shape = 's32[2]{0}', space=sflag, size = 0x8, scoped, tag = 'scoped memory for tpu_custom_call.1']
    #allocation10 [shape = 'u8[65536]{0}', space=vmem, size = 0x10000, scoped, tag = 'input window, operand 2, single buffered']
    #allocation11 [shape = 'u8[65536]{0}', space=vmem, size = 0x10000, scoped, tag = 'input window, operand 3, single buffered']
    #allocation12 [shape = 's32[1]{0}', space=sflag, size = 0x4, scoped, tag = 'scoped memory for tpu_custom_call.1']
    #allocation13 [shape = 'u8[1024]{0}', space=vmem, size = 0x400, scoped, tag = 'output window, operand 0']
    #allocation14 [shape = 'u8[1024]{0}', space=vmem, size = 0x400, scoped, tag = 'output window, operand 1']
    #allocation15 [shape = 's32[2]{0}', space=sflag, size = 0x8, scoped, tag = 'scoped memory for tpu_custom_call.1']
    #allocation16 [shape = 'u8[1024]{0}', space=vmem, size = 0x400, scoped, tag = 'output window, operand 2']
    #allocation17 [shape = 'u8[1024]{0}', space=vmem, size = 0x400, scoped, tag = 'output window, operand 3']
    #allocation18 [shape = 's32[2]{0}', space=sflag, size = 0x8, scoped, tag = 'scoped memory for tpu_custom_call.1']
    %17 = vsyncpa [#allocation6], 0
    %s18 = scalar_lea.sflag [#allocation6], 1
    %19 = vsyncpa %s18, 0
    %20 = vsyncpa [#allocation9], 0
    %s21 = scalar_lea.sflag [#allocation9], 1
    %22 = vsyncpa %s21, 0
    %23 = vsyncpa [#allocation12], 0
    %24 = vsyncpa [#allocation7], 0
    %s25 = scalar_lea.sflag [#allocation7], 1
    %26 = vsyncpa %s25, 0
    %27 = vsyncpa [#allocation15], 0
    %s28 = scalar_lea.sflag [#allocation15], 1
    %29 = vsyncpa %s28, 0
    %30 = vsyncpa [#allocation18], 0
    %s31 = scalar_lea.sflag [#allocation18], 1
    %32 = vsyncpa %s31, 0
    loop: start=0, step=1, limit=6
    $region2: #{tpu_custom_call.1} parent=1 // loop_pre_header
      _
    $region3: #{tpu_custom_call.1} parent=1 // loop_header
      %s34 = sphi 0, %s38
      %p35 = scmp.ge.s32.totalorder %s34, 6
      %s41 = sphi 0, %s53
      %s42 = sphi 0, %s49
      %s43 = sphi 0, %s41
      %s44 = sphi 0, %s42
      %s45 = sphi 0, %s43
      %s46 = sphi 0, %s44
      %s58 = sphi 0, %s60
      %s61 = sphi 0, %s58
      %s62 = sphi 0, %s61
      %s78 = sphi 0, %s62
      %s86 = sphi 0, %s88
      %s89 = sphi 0, %s86
      %s90 = sphi 0, %s89
      %s106 = sphi 0, %s90
      %s110 = sphi 0, %s110
      %s112 = sphi 0, %s110
      %s113 = sphi 0, %s112
      %s127 = sphi 0, %s113
      %s131 = sphi 0, %s131
      %s133 = sphi 0, %s131
      %s134 = sphi 0, %s133
      %s148 = sphi 0, %s134
      %s152 = sphi 0, %s152
      %s154 = sphi 0, %s152
      %s155 = sphi 0, %s154
      %s169 = sphi 0, %s155
      %s173 = sphi 0, %s173
      %s175 = sphi 0, %s173
      %s176 = sphi 0, %s175
      %s190 = sphi 0, %s176
      %s194 = sphi 0, %s194
      %s196 = sphi 0, %s194
      %s197 = sphi 0, %s196
      %s211 = sphi 0, %s197
      %s219 = sphi 0, %s221
      %s222 = sphi 0, %s219
      %s223 = sphi 0, %s222
      %s239 = sphi 0, %s223
      %s247 = sphi 0, %s249
      %s250 = sphi 0, %s247
      %s251 = sphi 0, %s250
      %s267 = sphi 0, %s251
      %s273 = sphi 0, %s275
      %s276 = sphi 0, %s273
      %s277 = sphi 0, %s276
      %s293 = sphi 0, %s277
      %s299 = sphi 0, %s301
      %s302 = sphi 0, %s299
      %s303 = sphi 0, %s302
      %s319 = sphi 0, %s303
    $region4: #{tpu_custom_call.1} parent=1 // loop_header_branch
      %37 = sbr.rel (%p35) target = $region8
    $region5: #{tpu_custom_call.1} parent=1 // loop_body
      %s39 = ssub.s32 %s34, 1
      %s40 = ssub.s32 %s34, 2
      %s47 = sadd.s32 1, %s42
      %p48 = scmp.ge.s32.totalorder %s47, 2
      %s49 = scalar_select %p48, 0, %s47
      %s50 = sadd.s32 1, %s41
      %s51 = scalar_select %p48, %s50, %s41
      %p52 = scmp.ge.s32.totalorder %s51, 2
      %s53 = scalar_select %p52, 0, %s51
      %s54 = ssub.s32 %s41, %s53
      %s55 = ssub.s32 %s42, %s49
      %s56 = sor.u32 %s54, %s55
      %p57 = scmp.eq.s32.totalorder %s56, 0
      %s59 = sadd.s32 %s58, 1
      %s60 = scalar_select %p57, %s58, %s59
      %p63 = pneg %p57
      %p64 = scmp.eq.s32.totalorder %s34, 3
      %p65 = por %p63, %p64
      %p66 = scmp.ne.s32.totalorder %s58, %s61
      %p67 = scmp.eq.s32.totalorder %s34, 0
      %p68 = por %p66, %p67
      %p69 = scmp.ne.s32.totalorder %s58, %s61
      %p70 = scmp.eq.s32.totalorder %s39, 3
      %p71 = por %p69, %p70
      %p72 = scmp.ne.s32.totalorder %s61, %s62
      %p73 = scmp.eq.s32.totalorder %s39, 0
      %p74 = por %p72, %p73
      %p75 = scmp.ne.s32.totalorder %s61, %s62
      %p76 = scmp.eq.s32.totalorder %s40, 3
      %p77 = por %p75, %p76
      %p79 = scmp.ne.s32.totalorder %s62, %s78
      %p80 = scmp.eq.s32.totalorder %s40, 0
      %p81 = por %p79, %p80
      %s82 = ssub.s32 %s41, %s53
      %s83 = ssub.s32 %s42, %s49
      %s84 = sor.u32 %s82, %s83
      %p85 = scmp.eq.s32.totalorder %s84, 0
      %s87 = sadd.s32 %s86, 1
      %s88 = scalar_select %p85, %s86, %s87
      %p91 = pneg %p85
      %p92 = scmp.eq.s32.totalorder %s34, 3
      %p93 = por %p91, %p92
      %p94 = scmp.ne.s32.totalorder %s86, %s89
      %p95 = scmp.eq.s32.totalorder %s34, 0
      %p96 = por %p94, %p95
      %p97 = scmp.ne.s32.totalorder %s86, %s89
      %p98 = scmp.eq.s32.totalorder %s39, 3
      %p99 = por %p97, %p98
      %p100 = scmp.ne.s32.totalorder %s89, %s90
      %p101 = scmp.eq.s32.totalorder %s39, 0
      %p102 = por %p100, %p101
      %p103 = scmp.ne.s32.totalorder %s89, %s90
      %p104 = scmp.eq.s32.totalorder %s40, 3
      %p105 = por %p103, %p104
      %p107 = scmp.ne.s32.totalorder %s90, %s106
      %p108 = scmp.eq.s32.totalorder %s40, 0
      %p109 = por %p107, %p108
      %s111 = sadd.s32 %s110, 1
      %p114 = scmp.eq.s32.totalorder %s34, 3
      %p115 = scmp.ne.s32.totalorder %s110, %s112
      %p116 = scmp.eq.s32.totalorder %s34, 0
      %p117 = por %p115, %p116
      %p118 = scmp.ne.s32.totalorder %s110, %s112
      %p119 = scmp.eq.s32.totalorder %s39, 3
      %p120 = por %p118, %p119
      %p121 = scmp.ne.s32.totalorder %s112, %s113
      %p122 = scmp.eq.s32.totalorder %s39, 0
      %p123 = por %p121, %p122
      %p124 = scmp.ne.s32.totalorder %s112, %s113
      %p125 = scmp.eq.s32.totalorder %s40, 3
      %p126 = por %p124, %p125
      %p128 = scmp.ne.s32.totalorder %s113, %s127
      %p129 = scmp.eq.s32.totalorder %s40, 0
      %p130 = por %p128, %p129
      %s132 = sadd.s32 %s131, 1
      %p135 = scmp.eq.s32.totalorder %s34, 3
      %p136 = scmp.ne.s32.totalorder %s131, %s133
      %p137 = scmp.eq.s32.totalorder %s34, 0
      %p138 = por %p136, %p137
      %p139 = scmp.ne.s32.totalorder %s131, %s133
      %p140 = scmp.eq.s32.totalorder %s39, 3
      %p141 = por %p139, %p140
      %p142 = scmp.ne.s32.totalorder %s133, %s134
      %p143 = scmp.eq.s32.totalorder %s39, 0
      %p144 = por %p142, %p143
      %p145 = scmp.ne.s32.totalorder %s133, %s134
      %p146 = scmp.eq.s32.totalorder %s40, 3
      %p147 = por %p145, %p146
      %p149 = scmp.ne.s32.totalorder %s134, %s148
      %p150 = scmp.eq.s32.totalorder %s40, 0
      %p151 = por %p149, %p150
      %s153 = sadd.s32 %s152, 1
      %p156 = scmp.eq.s32.totalorder %s34, 3
      %p157 = scmp.ne.s32.totalorder %s152, %s154
      %p158 = scmp.eq.s32.totalorder %s34, 0
      %p159 = por %p157, %p158
      %p160 = scmp.ne.s32.totalorder %s152, %s154
      %p161 = scmp.eq.s32.totalorder %s39, 3
      %p162 = por %p160, %p161
      %p163 = scmp.ne.s32.totalorder %s154, %s155
      %p164 = scmp.eq.s32.totalorder %s39, 0
      %p165 = por %p163, %p164
      %p166 = scmp.ne.s32.totalorder %s154, %s155
      %p167 = scmp.eq.s32.totalorder %s40, 3
      %p168 = por %p166, %p167
      %p170 = scmp.ne.s32.totalorder %s155, %s169
      %p171 = scmp.eq.s32.totalorder %s40, 0
      %p172 = por %p170, %p171
      %s174 = sadd.s32 %s173, 1
      %p177 = scmp.eq.s32.totalorder %s34, 3
      %p178 = scmp.ne.s32.totalorder %s173, %s175
      %p179 = scmp.eq.s32.totalorder %s34, 0
      %p180 = por %p178, %p179
      %p181 = scmp.ne.s32.totalorder %s173, %s175
      %p182 = scmp.eq.s32.totalorder %s39, 3
      %p183 = por %p181, %p182
      %p184 = scmp.ne.s32.totalorder %s175, %s176
      %p185 = scmp.eq.s32.totalorder %s39, 0
      %p186 = por %p184, %p185
      %p187 = scmp.ne.s32.totalorder %s175, %s176
      %p188 = scmp.eq.s32.totalorder %s40, 3
      %p189 = por %p187, %p188
      %p191 = scmp.ne.s32.totalorder %s176, %s190
      %p192 = scmp.eq.s32.totalorder %s40, 0
      %p193 = por %p191, %p192
      %s195 = sadd.s32 %s194, 1
      %p198 = scmp.eq.s32.totalorder %s34, 3
      %p199 = scmp.ne.s32.totalorder %s194, %s196
      %p200 = scmp.eq.s32.totalorder %s34, 0
      %p201 = por %p199, %p200
      %p202 = scmp.ne.s32.totalorder %s194, %s196
      %p203 = scmp.eq.s32.totalorder %s39, 3
      %p204 = por %p202, %p203
      %p205 = scmp.ne.s32.totalorder %s196, %s197
      %p206 = scmp.eq.s32.totalorder %s39, 0
      %p207 = por %p205, %p206
      %p208 = scmp.ne.s32.totalorder %s196, %s197
      %p209 = scmp.eq.s32.totalorder %s40, 3
      %p210 = por %p208, %p209
      %p212 = scmp.ne.s32.totalorder %s197, %s211
      %p213 = scmp.eq.s32.totalorder %s40, 0
      %p214 = por %p212, %p213
      %s215 = ssub.s32 %s41, %s53
      %s216 = ssub.s32 %s42, %s49
      %s217 = sor.u32 %s215, %s216
      %p218 = scmp.eq.s32.totalorder %s217, 0
      %s220 = sadd.s32 %s219, 1
      %s221 = scalar_select %p218, %s219, %s220
      %p224 = pneg %p218
      %p225 = scmp.eq.s32.totalorder %s34, 3
      %p226 = por %p224, %p225
      %p227 = scmp.ne.s32.totalorder %s219, %s222
      %p228 = scmp.eq.s32.totalorder %s34, 0
      %p229 = por %p227, %p228
      %p230 = scmp.ne.s32.totalorder %s219, %s222
      %p231 = scmp.eq.s32.totalorder %s39, 3
      %p232 = por %p230, %p231
      %p233 = scmp.ne.s32.totalorder %s222, %s223
      %p234 = scmp.eq.s32.totalorder %s39, 0
      %p235 = por %p233, %p234
      %p236 = scmp.ne.s32.totalorder %s222, %s223
      %p237 = scmp.eq.s32.totalorder %s40, 3
      %p238 = por %p236, %p237
      %p240 = scmp.ne.s32.totalorder %s223, %s239
      %p241 = scmp.eq.s32.totalorder %s40, 0
      %p242 = por %p240, %p241
      %s243 = ssub.s32 %s41, %s53
      %s244 = ssub.s32 %s42, %s49
      %s245 = sor.u32 %s243, %s244
      %p246 = scmp.eq.s32.totalorder %s245, 0
      %s248 = sadd.s32 %s247, 1
      %s249 = scalar_select %p246, %s247, %s248
      %p252 = pneg %p246
      %p253 = scmp.eq.s32.totalorder %s34, 3
      %p254 = por %p252, %p253
      %p255 = scmp.ne.s32.totalorder %s247, %s250
      %p256 = scmp.eq.s32.totalorder %s34, 0
      %p257 = por %p255, %p256
      %p258 = scmp.ne.s32.totalorder %s247, %s250
      %p259 = scmp.eq.s32.totalorder %s39, 3
      %p260 = por %p258, %p259
      %p261 = scmp.ne.s32.totalorder %s250, %s251
      %p262 = scmp.eq.s32.totalorder %s39, 0
      %p263 = por %p261, %p262
      %p264 = scmp.ne.s32.totalorder %s250, %s251
      %p265 = scmp.eq.s32.totalorder %s40, 3
      %p266 = por %p264, %p265
      %p268 = scmp.ne.s32.totalorder %s251, %s267
      %p269 = scmp.eq.s32.totalorder %s40, 0
      %p270 = por %p268, %p269
      %s271 = ssub.s32 %s41, %s53
      %p272 = scmp.eq.s32.totalorder %s271, 0
      %s274 = sadd.s32 %s273, 1
      %s275 = scalar_select %p272, %s273, %s274
      %p278 = pneg %p272
      %p279 = scmp.eq.s32.totalorder %s34, 3
      %p280 = por %p278, %p279
      %p281 = scmp.ne.s32.totalorder %s273, %s276
      %p282 = scmp.eq.s32.totalorder %s34, 0
      %p283 = por %p281, %p282
      %p284 = scmp.ne.s32.totalorder %s273, %s276
      %p285 = scmp.eq.s32.totalorder %s39, 3
      %p286 = por %p284, %p285
      %p287 = scmp.ne.s32.totalorder %s276, %s277
      %p288 = scmp.eq.s32.totalorder %s39, 0
      %p289 = por %p287, %p288
      %p290 = scmp.ne.s32.totalorder %s276, %s277
      %p291 = scmp.eq.s32.totalorder %s40, 3
      %p292 = por %p290, %p291
      %p294 = scmp.ne.s32.totalorder %s277, %s293
      %p295 = scmp.eq.s32.totalorder %s40, 0
      %p296 = por %p294, %p295
      %s297 = ssub.s32 %s41, %s53
      %p298 = scmp.eq.s32.totalorder %s297, 0
      %s300 = sadd.s32 %s299, 1
      %s301 = scalar_select %p298, %s299, %s300
      %p304 = pneg %p298
      %p305 = scmp.eq.s32.totalorder %s34, 3
      %p306 = por %p304, %p305
      %p307 = scmp.ne.s32.totalorder %s299, %s302
      %p308 = scmp.eq.s32.totalorder %s34, 0
      %p309 = por %p307, %p308
      %p310 = scmp.ne.s32.totalorder %s299, %s302
      %p311 = scmp.eq.s32.totalorder %s39, 3
      %p312 = por %p310, %p311
      %p313 = scmp.ne.s32.totalorder %s302, %s303
      %p314 = scmp.eq.s32.totalorder %s39, 0
      %p315 = por %p313, %p314
      %p316 = scmp.ne.s32.totalorder %s302, %s303
      %p317 = scmp.eq.s32.totalorder %s40, 3
      %p318 = por %p316, %p317
      %p320 = scmp.ne.s32.totalorder %s303, %s319
      %p321 = scmp.eq.s32.totalorder %s40, 0
      %p322 = por %p320, %p321
      %p323 = scmp.le.s32.totalorder 1, %s34
      %p324 = scmp.lt.s32.totalorder %s34, 5
      %p325 = pnand %p323, %p324
      %p326 = pneg %p325
      // Predicated region
      $region9: #{tpu_custom_call.1} parent=5 // pred_check
        _
      $region10: #{tpu_custom_call.1} parent=5 // pred_check_branch
        %328 = sbr.rel (%p325) target = $region12
      $region11: #{tpu_custom_call.1} parent=5 // pred_region
        %s329 = ssub.s32 %s34, 1
        // Predicated region
        $region13: #{tpu_custom_call.1} parent=11 // pred_check
          %p330 = pneg %p123
        $region14: #{tpu_custom_call.1} parent=11 // pred_check_branch
          %332 = sbr.rel (%p330) target = $region16
        $region15: #{tpu_custom_call.1} parent=11 // pred_region
          %s334 = ssub.s32 2048, 2048
          %335 = vsyncadd [#allocation9], %s334
          %s336 = sshll.u32 [#allocation10], 4
          %s337 = int_to_ptr.vmem [resolvable:$true] %s336
          %342 = dma.hbm_to_vmem [thread:$0]  %s2, 2048, %s337, [#allocation9], 128, 128, 8
        $region16: #{tpu_custom_call.1} parent=11 // pred_fallthru
          _
        // Predicated region
        $region17: #{tpu_custom_call.1} parent=11 // pred_check
          %p343 = pneg %p144
        $region18: #{tpu_custom_call.1} parent=11 // pred_check_branch
          %345 = sbr.rel (%p343) target = $region20
        $region19: #{tpu_custom_call.1} parent=11 // pred_region
          %s347 = ssub.s32 2048, 2048
          %348 = vsyncadd [#allocation12], %s347
          %s349 = sshll.u32 [#allocation11], 4
          %s350 = int_to_ptr.vmem [resolvable:$true] %s349
          %355 = dma.hbm_to_vmem [thread:$0]  %s3, 2048, %s350, [#allocation12], 128, 128, 8
        $region20: #{tpu_custom_call.1} parent=11 // pred_fallthru
          _
        // Predicated region
        $region21: #{tpu_custom_call.1} parent=11 // pred_check
          %p356 = pneg %p165
        $region22: #{tpu_custom_call.1} parent=11 // pred_check_branch
          %358 = sbr.rel (%p356) target = $region24
        $region23: #{tpu_custom_call.1} parent=11 // pred_region
          _
        $region24: #{tpu_custom_call.1} parent=11 // pred_fallthru
          _
        // Predicated region
        $region25: #{tpu_custom_call.1} parent=11 // pred_check
          %p359 = pneg %p186
        $region26: #{tpu_custom_call.1} parent=11 // pred_check_branch
          %361 = sbr.rel (%p359) target = $region28
        $region27: #{tpu_custom_call.1} parent=11 // pred_region
          _
        $region28: #{tpu_custom_call.1} parent=11 // pred_fallthru
          _
        // Predicated region
        $region29: #{tpu_custom_call.1} parent=11 // pred_check
          %p362 = pneg %p207
        $region30: #{tpu_custom_call.1} parent=11 // pred_check_branch
          %364 = sbr.rel (%p362) target = $region32
        $region31: #{tpu_custom_call.1} parent=11 // pred_region
          _
        $region32: #{tpu_custom_call.1} parent=11 // pred_fallthru
          _
      $region12: #{tpu_custom_call.1} parent=5 // pred_fallthru
        _
      %p365 = scmp.lt.s32.totalorder %s34, 4
      // Predicated region
      $region33: #{tpu_custom_call.1} parent=5 // pred_check
        %p366 = pneg %p365
      $region34: #{tpu_custom_call.1} parent=5 // pred_check_branch
        %368 = sbr.rel (%p366) target = $region36
      $region35: #{tpu_custom_call.1} parent=5 // pred_region
        // Predicated region
        $region37: #{tpu_custom_call.1} parent=35 // pred_check
          %p369 = pneg %p68
        $region38: #{tpu_custom_call.1} parent=35 // pred_check_branch
          %371 = sbr.rel (%p369) target = $region40
        $region39: #{tpu_custom_call.1} parent=35 // pred_region
          %s372 = sand.u32 %s58, 1
          %s373 = scalar_lea.sflag [#allocation6], %s372
          %s374 = sand.u32 %s58, 1
          %s375 = smul.addr %s374, 128
          %s376 = scalar_lea.vmem [#allocation5], %s375
          %s377 = smul.u32 16, %s42
          %s379 = ssub.s32 2048, 2048
          %380 = vsyncadd %s373, %s379
          %s381 = smul.addr %s41, 32
          %s382 = sadd.s32 %s377, %s381
          %s383 = smul.addr %s382, 128
          %s384 = scalar_lea.hbm %s0, %s383
          %s385 = sshll.u32 %s376, 4
          %s386 = int_to_ptr.vmem [resolvable:$true] %s385
          %391 = dma.hbm_to_vmem [thread:$0]  %s384, 2048, %s386, %s373, 128, 128, 8
        $region40: #{tpu_custom_call.1} parent=35 // pred_fallthru
          _
        // Predicated region
        $region41: #{tpu_custom_call.1} parent=35 // pred_check
          %p392 = pneg %p96
        $region42: #{tpu_custom_call.1} parent=35 // pred_check_branch
          %394 = sbr.rel (%p392) target = $region44
        $region43: #{tpu_custom_call.1} parent=35 // pred_region
          %s395 = sand.u32 %s34, 1
          %s396 = scalar_lea.sflag [#allocation9], %s395
          %s397 = sand.u32 %s86, 1
          %s398 = smul.addr %s397, 128
          %s399 = scalar_lea.vmem [#allocation8], %s398
          %s400 = smul.u32 16, %s42
          %s402 = ssub.s32 2048, 2048
          %403 = vsyncadd %s396, %s402
          %s404 = smul.addr %s41, 32
          %s405 = sadd.s32 %s400, %s404
          %s406 = smul.addr %s405, 128
          %s407 = scalar_lea.hbm %s1, %s406
          %s408 = sshll.u32 %s399, 4
          %s409 = int_to_ptr.vmem [resolvable:$true] %s408
          %414 = dma.hbm_to_vmem [thread:$0]  %s407, 2048, %s409, %s396, 128, 128, 8
        $region44: #{tpu_custom_call.1} parent=35 // pred_fallthru
          _
      $region36: #{tpu_custom_call.1} parent=5 // pred_fallthru
        _
      %p415 = scmp.le.s32.totalorder 1, %s34
      %p416 = scmp.lt.s32.totalorder %s34, 5
      %p417 = pnand %p415, %p416
      %p418 = pneg %p417
      // Predicated region
      $region45: #{tpu_custom_call.1} parent=5 // pred_check
        _
      $region46: #{tpu_custom_call.1} parent=5 // pred_check_branch
        %420 = sbr.rel (%p417) target = $region48
      $region47: #{tpu_custom_call.1} parent=5 // pred_region
        %s421 = ssub.s32 %s34, 1
        %s422 = sand.u32 %s61, 1
        %s423 = scalar_lea.sflag [#allocation6], %s422
        %s424 = sand.u32 %s61, 1
        %s425 = smul.addr %s424, 128
        %s426 = scalar_lea.vmem [#allocation5], %s425
        // Predicated region
        $region49: #{tpu_custom_call.1} parent=47 // pred_check
          %p427 = pneg %p74
        $region50: #{tpu_custom_call.1} parent=47 // pred_check_branch
          %429 = sbr.rel (%p427) target = $region52
        $region51: #{tpu_custom_call.1} parent=47 // pred_region
          %430 = dma.done %s423, 2048
        $region52: #{tpu_custom_call.1} parent=47 // pred_fallthru
          _
        %s431 = sand.u32 %s39, 1
        %s432 = scalar_lea.sflag [#allocation9], %s431
        %s433 = sand.u32 %s89, 1
        %s434 = smul.addr %s433, 128
        %s435 = scalar_lea.vmem [#allocation8], %s434
        // Predicated region
        $region53: #{tpu_custom_call.1} parent=47 // pred_check
          %p436 = pneg %p102
        $region54: #{tpu_custom_call.1} parent=47 // pred_check_branch
          %438 = sbr.rel (%p436) target = $region56
        $region55: #{tpu_custom_call.1} parent=47 // pred_region
          %439 = dma.done %s432, 2048
        $region56: #{tpu_custom_call.1} parent=47 // pred_fallthru
          _
        // Predicated region
        $region57: #{tpu_custom_call.1} parent=47 // pred_check
          %p440 = pneg %p123
        $region58: #{tpu_custom_call.1} parent=47 // pred_check_branch
          %442 = sbr.rel (%p440) target = $region60
        $region59: #{tpu_custom_call.1} parent=47 // pred_region
          %443 = dma.done [#allocation9], 2048
        $region60: #{tpu_custom_call.1} parent=47 // pred_fallthru
          _
        // Predicated region
        $region61: #{tpu_custom_call.1} parent=47 // pred_check
          %p444 = pneg %p144
        $region62: #{tpu_custom_call.1} parent=47 // pred_check_branch
          %446 = sbr.rel (%p444) target = $region64
        $region63: #{tpu_custom_call.1} parent=47 // pred_region
          %447 = dma.done [#allocation12], 2048
        $region64: #{tpu_custom_call.1} parent=47 // pred_fallthru
          _
        %s448 = sand.u32 %s61, 1
        %s449 = scalar_lea.sflag [#allocation6], %s448
        %s450 = sand.u32 %s61, 1
        %s451 = smul.addr %s450, 128
        %s452 = scalar_lea.vmem [#allocation5], %s451
        %p453 = pneg %p74
        %p454 = pneg %p71
        %s455 = sand.u32 %s39, 1
        %s456 = scalar_lea.sflag [#allocation9], %s455
        %s457 = sand.u32 %s89, 1
        %s458 = smul.addr %s457, 128
        %s459 = scalar_lea.vmem [#allocation8], %s458
        %p460 = pneg %p102
        %p461 = pneg %p99
        %p462 = pneg %p123
        %p463 = pneg %p120
        %p464 = pneg %p144
        %p465 = pneg %p141
        %p466 = pneg %p165
        %p467 = pneg %p162
        %p468 = pneg %p186
        %p469 = pneg %p183
        %p470 = pneg %p207
        %p471 = pneg %p204
        %p472 = pneg %p235
        %p473 = pneg %p232
        %s474 = sand.u32 %s222, 1
        %s475 = scalar_lea.sflag [#allocation7], %s474
        %s476 = sand.u32 %s222, 1
        %s477 = scalar_lea.vmem [#allocation13], %s476
        %p478 = pneg %p263
        %p479 = pneg %p260
        %s480 = sand.u32 %s39, 1
        %s481 = scalar_lea.sflag [#allocation15], %s480
        %s482 = sand.u32 %s250, 1
        %s483 = scalar_lea.vmem [#allocation14], %s482
        %p484 = pneg %p289
        %p485 = pneg %p286
        %s486 = sand.u32 %s39, 1
        %s487 = scalar_lea.sflag [#allocation15], %s486
        %s488 = sand.u32 %s276, 1
        %s489 = scalar_lea.vmem [#allocation16], %s488
        %p490 = pneg %p315
        %p491 = pneg %p312
        %s492 = sand.u32 %s302, 1
        %s493 = scalar_lea.sflag [#allocation18], %s492
        %s494 = sand.u32 %s302, 1
        %s495 = scalar_lea.vmem [#allocation17], %s494
        %s496 = smul.u32 16, %s44
        %s497 = smul.u32 16, %s44
        %p498 = scmp.eq.s32.totalorder %s44, 0
        // Predicated region
        $region65: #{tpu_custom_call.1} parent=47 // pred_check
          %p499 = pneg %p498
        $region66: #{tpu_custom_call.1} parent=47 // pred_check_branch
          %501 = sbr.rel (%p499) target = $region68
        $region67: #{tpu_custom_call.1} parent=47 // pred_region
          %502 = vst [vmem:[#allocation2] sm:$0x1] 0.0
          %503 = vst [vmem:[#allocation3] sm:$0x1] 0.0
        $region68: #{tpu_custom_call.1} parent=47 // pred_fallthru
          _
        %v504 = vld [vmem:[%s426] sm:$0xff]
        %v505 = vld [vmem:[%s426 + $0x8] sm:$0xff]
        %v506 = vld [vmem:[%s426 + $0x10] sm:$0xff]
        %v507 = vld [vmem:[%s426 + $0x18] sm:$0xff]
        %v508 = vld [vmem:[%s426 + $0x20] sm:$0xff]
        %v509 = vld [vmem:[%s426 + $0x28] sm:$0xff]
        %v510 = vld [vmem:[%s426 + $0x30] sm:$0xff]
        %v511 = vld [vmem:[%s426 + $0x38] sm:$0xff]
        %v512 = vld [vmem:[%s426 + $0x40] sm:$0xff]
        %v513 = vld [vmem:[%s426 + $0x48] sm:$0xff]
        %v514 = vld [vmem:[%s426 + $0x50] sm:$0xff]
        %v515 = vld [vmem:[%s426 + $0x58] sm:$0xff]
        %v516 = vld [vmem:[%s426 + $0x60] sm:$0xff]
        %v517 = vld [vmem:[%s426 + $0x68] sm:$0xff]
        %v518 = vld [vmem:[%s426 + $0x70] sm:$0xff]
        %v519 = vld [vmem:[%s426 + $0x78] sm:$0xff]
        %v520 = vld [vmem:[%s435] sm:$0xff]
        %v521 = vld [vmem:[%s435 + $0x8] sm:$0xff]
        %v522 = vld [vmem:[%s435 + $0x10] sm:$0xff]
        %v523 = vld [vmem:[%s435 + $0x18] sm:$0xff]
        %v524 = vld [vmem:[%s435 + $0x20] sm:$0xff]
        %v525 = vld [vmem:[%s435 + $0x28] sm:$0xff]
        %v526 = vld [vmem:[%s435 + $0x30] sm:$0xff]
        %v527 = vld [vmem:[%s435 + $0x38] sm:$0xff]
        %v528 = vld [vmem:[%s435 + $0x40] sm:$0xff]
        %v529 = vld [vmem:[%s435 + $0x48] sm:$0xff]
        %v530 = vld [vmem:[%s435 + $0x50] sm:$0xff]
        %v531 = vld [vmem:[%s435 + $0x58] sm:$0xff]
        %v532 = vld [vmem:[%s435 + $0x60] sm:$0xff]
        %v533 = vld [vmem:[%s435 + $0x68] sm:$0xff]
        %v534 = vld [vmem:[%s435 + $0x70] sm:$0xff]
        %v535 = vld [vmem:[%s435 + $0x78] sm:$0xff]
        %v536 = vsub.f32 %v520, %v504
        %v537 = vsub.f32 %v521, %v505
        %v538 = vsub.f32 %v522, %v506
        %v539 = vsub.f32 %v523, %v507
        %v540 = vsub.f32 %v524, %v508
        %v541 = vsub.f32 %v525, %v509
        %v542 = vsub.f32 %v526, %v510
        %v543 = vsub.f32 %v527, %v511
        %v544 = vsub.f32 %v528, %v512
        %v545 = vsub.f32 %v529, %v513
        %v546 = vsub.f32 %v530, %v514
        %v547 = vsub.f32 %v531, %v515
        %v548 = vsub.f32 %v532, %v516
        %v549 = vsub.f32 %v533, %v517
        %v550 = vsub.f32 %v534, %v518
        %v551 = vsub.f32 %v535, %v519
        %v552 = vld [vmem:[#allocation10] sm:$0xff]
        %v553 = vld [vmem:[#allocation10 + $0x8] sm:$0xff]
        %v554 = vld [vmem:[#allocation10 + $0x10] sm:$0xff]
        %v555 = vld [vmem:[#allocation10 + $0x18] sm:$0xff]
        %v556 = vld [vmem:[#allocation10 + $0x20] sm:$0xff]
        %v557 = vld [vmem:[#allocation10 + $0x28] sm:$0xff]
        %v558 = vld [vmem:[#allocation10 + $0x30] sm:$0xff]
        %v559 = vld [vmem:[#allocation10 + $0x38] sm:$0xff]
        %v560 = vld [vmem:[#allocation10 + $0x40] sm:$0xff]
        %v561 = vld [vmem:[#allocation10 + $0x48] sm:$0xff]
        %v562 = vld [vmem:[#allocation10 + $0x50] sm:$0xff]
        %v563 = vld [vmem:[#allocation10 + $0x58] sm:$0xff]
        %v564 = vld [vmem:[#allocation10 + $0x60] sm:$0xff]
        %v565 = vld [vmem:[#allocation10 + $0x68] sm:$0xff]
        %v566 = vld [vmem:[#allocation10 + $0x70] sm:$0xff]
        %v567 = vld [vmem:[#allocation10 + $0x78] sm:$0xff]
        %v568 = vld [vmem:[#allocation11] sm:$0xff]
        %v569 = vld [vmem:[#allocation11 + $0x8] sm:$0xff]
        %v570 = vld [vmem:[#allocation11 + $0x10] sm:$0xff]
        %v571 = vld [vmem:[#allocation11 + $0x18] sm:$0xff]
        %v572 = vld [vmem:[#allocation11 + $0x20] sm:$0xff]
        %v573 = vld [vmem:[#allocation11 + $0x28] sm:$0xff]
        %v574 = vld [vmem:[#allocation11 + $0x30] sm:$0xff]
        %v575 = vld [vmem:[#allocation11 + $0x38] sm:$0xff]
        %v576 = vld [vmem:[#allocation11 + $0x40] sm:$0xff]
        %v577 = vld [vmem:[#allocation11 + $0x48] sm:$0xff]
        %v578 = vld [vmem:[#allocation11 + $0x50] sm:$0xff]
        %v579 = vld [vmem:[#allocation11 + $0x58] sm:$0xff]
        %v580 = vld [vmem:[#allocation11 + $0x60] sm:$0xff]
        %v581 = vld [vmem:[#allocation11 + $0x68] sm:$0xff]
        %v582 = vld [vmem:[#allocation11 + $0x70] sm:$0xff]
        %v583 = vld [vmem:[#allocation11 + $0x78] sm:$0xff]
        %v584 = vld [vmem:[%s4] sm:$0x1]
        %585 = vmatprep.subr.mxu0 0.0
        %586 = vmatpush1.msra.mxu0 %v583
        %587 = vmatprep.subr.mxu0 0.0
        %588 = vmatpush1.msra.mxu0 %v582
        %589 = vmatprep.subr.mxu0 0.0
        %590 = vmatpush1.msra.mxu0 %v581
        %591 = vmatprep.subr.mxu0 0.0
        %592 = vmatpush1.msra.mxu0 %v580
        %593 = vmatprep.subr.mxu0 0.0
        %594 = vmatpush1.msra.mxu0 %v579
        %595 = vmatprep.subr.mxu0 0.0
        %596 = vmatpush1.msra.mxu0 %v578
        %597 = vmatprep.subr.mxu0 0.0
        %598 = vmatpush1.msra.mxu0 %v577
        %599 = vmatprep.subr.mxu0 0.0
        %600 = vmatpush1.msra.mxu0 %v576
        %601 = vmatprep.subr.mxu0 0.0
        %602 = vmatpush1.msra.mxu0 %v575
        %603 = vmatprep.subr.mxu0 0.0
        %604 = vmatpush1.msra.mxu0 %v574
        %605 = vmatprep.subr.mxu0 0.0
        %606 = vmatpush1.msra.mxu0 %v573
        %607 = vmatprep.subr.mxu0 0.0
        %608 = vmatpush1.msra.mxu0 %v572
        %609 = vmatprep.subr.mxu0 0.0
        %610 = vmatpush1.msra.mxu0 %v571
        %611 = vmatprep.subr.mxu0 0.0
        %612 = vmatpush1.msra.mxu0 %v570
        %613 = vmatprep.subr.mxu0 0.0
        %614 = vmatpush1.msra.mxu0 %v569
        %615 = vmatprep.subr.mxu0 0.0
        %616 = vmatpush1.msra.mxu0 %v568
        %617 = vmatprep.subr.mxu0 0.0
        %618 = vmatpush2.msra.mxu0 0.0
        %619 = vmatprep.subr.mxu0 0.0
        %620 = vmatpush2.msra.mxu0 0.0
        %621 = vmatprep.subr.mxu0 0.0
        %622 = vmatpush2.msra.mxu0 0.0
        %623 = vmatprep.subr.mxu0 0.0
        %624 = vmatpush2.msra.mxu0 0.0
        %625 = vmatprep.subr.mxu0 0.0
        %626 = vmatpush2.msra.mxu0 0.0
        %627 = vmatprep.subr.mxu0 0.0
        %628 = vmatpush2.msra.mxu0 0.0
        %629 = vmatprep.subr.mxu0 0.0
        %630 = vmatpush2.msra.mxu0 0.0
        %631 = vmatprep.subr.mxu0 0.0
        %632 = vmatpush2.msra.mxu0 0.0
        %633 = vmatprep.subr.mxu0 0.0
        %634 = vmatpush2.msra.mxu0 0.0
        %635 = vmatprep.subr.mxu0 0.0
        %636 = vmatpush2.msra.mxu0 0.0
        %637 = vmatprep.subr.mxu0 0.0
        %638 = vmatpush2.msra.mxu0 0.0
        %639 = vmatprep.subr.mxu0 0.0
        %640 = vmatpush2.msra.mxu0 0.0
        %641 = vmatprep.subr.mxu0 0.0
        %642 = vmatpush2.msra.mxu0 0.0
        %643 = vmatprep.subr.mxu0 0.0
        %644 = vmatpush2.msra.mxu0 0.0
        %645 = vmatprep.subr.mxu0 0.0
        %646 = vmatpush2.msra.mxu0 0.0
        %647 = vmatprep.subr.mxu0 0.0
        %648 = vmatpush2.msra.mxu0 0.0
        %649 = vmatprep.mubr.f32.mxu0 0.0
        %650 = vmatmul.mubr.f32.gmra.mxu0 %v536
        %v651 = vpop.f32.mrf.mxu0
        %v652 = vadd.f32 0.0, %v651
        %v653 = vpop.f32.mrf.mxu0
        %654 = vmatprep.mubr.f32.mxu0 0.0
        %655 = vmatmul.mubr.f32.gmra.mxu0 %v537
        %v656 = vpop.f32.mrf.mxu0
        %v657 = vadd.f32 0.0, %v656
        %v658 = vpop.f32.mrf.mxu0
        %659 = vmatprep.mubr.f32.mxu0 0.0
        %660 = vmatmul.mubr.f32.gmra.mxu0 %v538
        %v661 = vpop.f32.mrf.mxu0
        %v662 = vadd.f32 0.0, %v661
        %v663 = vpop.f32.mrf.mxu0
        %664 = vmatprep.mubr.f32.mxu0 0.0
        %665 = vmatmul.mubr.f32.gmra.mxu0 %v539
        %v666 = vpop.f32.mrf.mxu0
        %v667 = vadd.f32 0.0, %v666
        %v668 = vpop.f32.mrf.mxu0
        %669 = vmatprep.mubr.f32.mxu0 0.0
        %670 = vmatmul.mubr.f32.gmra.mxu0 %v540
        %v671 = vpop.f32.mrf.mxu0
        %v672 = vadd.f32 0.0, %v671
        %v673 = vpop.f32.mrf.mxu0
        %674 = vmatprep.mubr.f32.mxu0 0.0
        %675 = vmatmul.mubr.f32.gmra.mxu0 %v541
        %v676 = vpop.f32.mrf.mxu0
        %v677 = vadd.f32 0.0, %v676
        %v678 = vpop.f32.mrf.mxu0
        %679 = vmatprep.mubr.f32.mxu0 0.0
        %680 = vmatmul.mubr.f32.gmra.mxu0 %v542
        %v681 = vpop.f32.mrf.mxu0
        %v682 = vadd.f32 0.0, %v681
        %v683 = vpop.f32.mrf.mxu0
        %684 = vmatprep.mubr.f32.mxu0 0.0
        %685 = vmatmul.mubr.f32.gmra.mxu0 %v543
        %v686 = vpop.f32.mrf.mxu0
        %v687 = vadd.f32 0.0, %v686
        %v688 = vpop.f32.mrf.mxu0
        %689 = vmatprep.mubr.f32.mxu0 0.0
        %690 = vmatmul.mubr.f32.gmra.mxu0 %v544
        %v691 = vpop.f32.mrf.mxu0
        %v692 = vadd.f32 0.0, %v691
        %v693 = vpop.f32.mrf.mxu0
        %694 = vmatprep.mubr.f32.mxu0 0.0
        %695 = vmatmul.mubr.f32.gmra.mxu0 %v545
        %v696 = vpop.f32.mrf.mxu0
        %v697 = vadd.f32 0.0, %v696
        %v698 = vpop.f32.mrf.mxu0
        %699 = vmatprep.mubr.f32.mxu0 0.0
        %700 = vmatmul.mubr.f32.gmra.mxu0 %v546
        %v701 = vpop.f32.mrf.mxu0
        %v702 = vadd.f32 0.0, %v701
        %v703 = vpop.f32.mrf.mxu0
        %704 = vmatprep.mubr.f32.mxu0 0.0
        %705 = vmatmul.mubr.f32.gmra.mxu0 %v547
        %v706 = vpop.f32.mrf.mxu0
        %v707 = vadd.f32 0.0, %v706
        %v708 = vpop.f32.mrf.mxu0
        %709 = vmatprep.mubr.f32.mxu0 0.0
        %710 = vmatmul.mubr.f32.gmra.mxu0 %v548
        %v711 = vpop.f32.mrf.mxu0
        %v712 = vadd.f32 0.0, %v711
        %v713 = vpop.f32.mrf.mxu0
        %714 = vmatprep.mubr.f32.mxu0 0.0
        %715 = vmatmul.mubr.f32.gmra.mxu0 %v549
        %v716 = vpop.f32.mrf.mxu0
        %v717 = vadd.f32 0.0, %v716
        %v718 = vpop.f32.mrf.mxu0
        %719 = vmatprep.mubr.f32.mxu0 0.0
        %720 = vmatmul.mubr.f32.gmra.mxu0 %v550
        %v721 = vpop.f32.mrf.mxu0
        %v722 = vadd.f32 0.0, %v721
        %v723 = vpop.f32.mrf.mxu0
        %724 = vmatprep.mubr.f32.mxu0 0.0
        %725 = vmatmul.mubr.f32.gmra.mxu0 %v551
        %v726 = vpop.f32.mrf.mxu0
        %v727 = vadd.f32 0.0, %v726
        %v728 = vpop.f32.mrf.mxu0
        %729 = vdwg.mxu0
        %730 = vmatprep.subr.mxu0 0.0
        %731 = vmatpush1.msra.mxu0 %v567
        %732 = vmatprep.subr.mxu0 0.0
        %733 = vmatpush1.msra.mxu0 %v566
        %734 = vmatprep.subr.mxu0 0.0
        %735 = vmatpush1.msra.mxu0 %v565
        %736 = vmatprep.subr.mxu0 0.0
        %737 = vmatpush1.msra.mxu0 %v564
        %738 = vmatprep.subr.mxu0 0.0
        %739 = vmatpush1.msra.mxu0 %v563
        %740 = vmatprep.subr.mxu0 0.0
        %741 = vmatpush1.msra.mxu0 %v562
        %742 = vmatprep.subr.mxu0 0.0
        %743 = vmatpush1.msra.mxu0 %v561
        %744 = vmatprep.subr.mxu0 0.0
        %745 = vmatpush1.msra.mxu0 %v560
        %746 = vmatprep.subr.mxu0 0.0
        %747 = vmatpush1.msra.mxu0 %v559
        %748 = vmatprep.subr.mxu0 0.0
        %749 = vmatpush1.msra.mxu0 %v558
        %750 = vmatprep.subr.mxu0 0.0
        %751 = vmatpush1.msra.mxu0 %v557
        %752 = vmatprep.subr.mxu0 0.0
        %753 = vmatpush1.msra.mxu0 %v556
        %754 = vmatprep.subr.mxu0 0.0
        %755 = vmatpush1.msra.mxu0 %v555
        %756 = vmatprep.subr.mxu0 0.0
        %757 = vmatpush1.msra.mxu0 %v554
        %758 = vmatprep.subr.mxu0 0.0
        %759 = vmatpush1.msra.mxu0 %v553
        %760 = vmatprep.subr.mxu0 0.0
        %761 = vmatpush1.msra.mxu0 %v552
        %762 = vmatprep.subr.mxu0 0.0
        %763 = vmatpush2.msra.mxu0 0.0
        %764 = vmatprep.subr.mxu0 0.0
        %765 = vmatpush2.msra.mxu0 0.0
        %766 = vmatprep.subr.mxu0 0.0
        %767 = vmatpush2.msra.mxu0 0.0
        %768 = vmatprep.subr.mxu0 0.0
        %769 = vmatpush2.msra.mxu0 0.0
        %770 = vmatprep.subr.mxu0 0.0
        %771 = vmatpush2.msra.mxu0 0.0
        %772 = vmatprep.subr.mxu0 0.0
        %773 = vmatpush2.msra.mxu0 0.0
        %774 = vmatprep.subr.mxu0 0.0
        %775 = vmatpush2.msra.mxu0 0.0
        %776 = vmatprep.subr.mxu0 0.0
        %777 = vmatpush2.msra.mxu0 0.0
        %778 = vmatprep.subr.mxu0 0.0
        %779 = vmatpush2.msra.mxu0 0.0
        %780 = vmatprep.subr.mxu0 0.0
        %781 = vmatpush2.msra.mxu0 0.0
        %782 = vmatprep.subr.mxu0 0.0
        %783 = vmatpush2.msra.mxu0 0.0
        %784 = vmatprep.subr.mxu0 0.0
        %785 = vmatpush2.msra.mxu0 0.0
        %786 = vmatprep.subr.mxu0 0.0
        %787 = vmatpush2.msra.mxu0 0.0
        %788 = vmatprep.subr.mxu0 0.0
        %789 = vmatpush2.msra.mxu0 0.0
        %790 = vmatprep.subr.mxu0 0.0
        %791 = vmatpush2.msra.mxu0 0.0
        %792 = vmatprep.subr.mxu0 0.0
        %793 = vmatpush2.msra.mxu0 0.0
        %794 = vmatprep.mubr.f32.mxu0 0.0
        %795 = vmatmul.mubr.f32.gmra.mxu0 %v504
        %v796 = vpop.f32.mrf.mxu0
        %v797 = vadd.f32 %v652, %v796
        %v798 = vpop.f32.mrf.mxu0
        %799 = vmatprep.mubr.f32.mxu0 0.0
        %800 = vmatmul.mubr.f32.gmra.mxu0 %v505
        %v801 = vpop.f32.mrf.mxu0
        %v802 = vadd.f32 %v657, %v801
        %v803 = vpop.f32.mrf.mxu0
        %804 = vmatprep.mubr.f32.mxu0 0.0
        %805 = vmatmul.mubr.f32.gmra.mxu0 %v506
        %v806 = vpop.f32.mrf.mxu0
        %v807 = vadd.f32 %v662, %v806
        %v808 = vpop.f32.mrf.mxu0
        %809 = vmatprep.mubr.f32.mxu0 0.0
        %810 = vmatmul.mubr.f32.gmra.mxu0 %v507
        %v811 = vpop.f32.mrf.mxu0
        %v812 = vadd.f32 %v667, %v811
        %v813 = vpop.f32.mrf.mxu0
        %814 = vmatprep.mubr.f32.mxu0 0.0
        %815 = vmatmul.mubr.f32.gmra.mxu0 %v508
        %v816 = vpop.f32.mrf.mxu0
        %v817 = vadd.f32 %v672, %v816
        %v818 = vpop.f32.mrf.mxu0
        %819 = vmatprep.mubr.f32.mxu0 0.0
        %820 = vmatmul.mubr.f32.gmra.mxu0 %v509
        %v821 = vpop.f32.mrf.mxu0
        %v822 = vadd.f32 %v677, %v821
        %v823 = vpop.f32.mrf.mxu0
        %824 = vmatprep.mubr.f32.mxu0 0.0
        %825 = vmatmul.mubr.f32.gmra.mxu0 %v510
        %v826 = vpop.f32.mrf.mxu0
        %v827 = vadd.f32 %v682, %v826
        %v828 = vpop.f32.mrf.mxu0
        %829 = vmatprep.mubr.f32.mxu0 0.0
        %830 = vmatmul.mubr.f32.gmra.mxu0 %v511
        %v831 = vpop.f32.mrf.mxu0
        %v832 = vadd.f32 %v687, %v831
        %v833 = vpop.f32.mrf.mxu0
        %834 = vmatprep.mubr.f32.mxu0 0.0
        %835 = vmatmul.mubr.f32.gmra.mxu0 %v512
        %v836 = vpop.f32.mrf.mxu0
        %v837 = vadd.f32 %v692, %v836
        %v838 = vpop.f32.mrf.mxu0
        %839 = vmatprep.mubr.f32.mxu0 0.0
        %840 = vmatmul.mubr.f32.gmra.mxu0 %v513
        %v841 = vpop.f32.mrf.mxu0
        %v842 = vadd.f32 %v697, %v841
        %v843 = vpop.f32.mrf.mxu0
        %844 = vmatprep.mubr.f32.mxu0 0.0
        %845 = vmatmul.mubr.f32.gmra.mxu0 %v514
        %v846 = vpop.f32.mrf.mxu0
        %v847 = vadd.f32 %v702, %v846
        %v848 = vpop.f32.mrf.mxu0
        %849 = vmatprep.mubr.f32.mxu0 0.0
        %850 = vmatmul.mubr.f32.gmra.mxu0 %v515
        %v851 = vpop.f32.mrf.mxu0
        %v852 = vadd.f32 %v707, %v851
        %v853 = vpop.f32.mrf.mxu0
        %854 = vmatprep.mubr.f32.mxu0 0.0
        %855 = vmatmul.mubr.f32.gmra.mxu0 %v516
        %v856 = vpop.f32.mrf.mxu0
        %v857 = vadd.f32 %v712, %v856
        %v858 = vpop.f32.mrf.mxu0
        %859 = vmatprep.mubr.f32.mxu0 0.0
        %860 = vmatmul.mubr.f32.gmra.mxu0 %v517
        %v861 = vpop.f32.mrf.mxu0
        %v862 = vadd.f32 %v717, %v861
        %v863 = vpop.f32.mrf.mxu0
        %864 = vmatprep.mubr.f32.mxu0 0.0
        %865 = vmatmul.mubr.f32.gmra.mxu0 %v518
        %v866 = vpop.f32.mrf.mxu0
        %v867 = vadd.f32 %v722, %v866
        %v868 = vpop.f32.mrf.mxu0
        %869 = vmatprep.mubr.f32.mxu0 0.0
        %870 = vmatmul.mubr.f32.gmra.mxu0 %v519
        %v871 = vpop.f32.mrf.mxu0
        %v872 = vadd.f32 %v727, %v871
        %v873 = vpop.f32.mrf.mxu0
        %874 = vdwg.mxu0
        %v876 = vlaneseq
        %v877 = vshrl.u32 %v876, 7
        %v878 = vsub.s32 0, %v877
        %v879 = vrot.slane %v584, %v878
        %v881 = vadd.f32 %v797, %v879
        %v882 = vadd.f32 %v802, %v879
        %v883 = vadd.f32 %v807, %v879
        %v884 = vadd.f32 %v812, %v879
        %v885 = vadd.f32 %v817, %v879
        %v886 = vadd.f32 %v822, %v879
        %v887 = vadd.f32 %v827, %v879
        %v888 = vadd.f32 %v832, %v879
        %v889 = vadd.f32 %v837, %v879
        %v890 = vadd.f32 %v842, %v879
        %v891 = vadd.f32 %v847, %v879
        %v892 = vadd.f32 %v852, %v879
        %v893 = vadd.f32 %v857, %v879
        %v894 = vadd.f32 %v862, %v879
        %v895 = vadd.f32 %v867, %v879
        %v896 = vadd.f32 %v872, %v879
        %v897 = vmax.f32 %v881, 0.0
        %v898 = vmax.f32 %v882, 0.0
        %v899 = vmax.f32 %v883, 0.0
        %v900 = vmax.f32 %v884, 0.0
        %v901 = vmax.f32 %v885, 0.0
        %v902 = vmax.f32 %v886, 0.0
        %v903 = vmax.f32 %v887, 0.0
        %v904 = vmax.f32 %v888, 0.0
        %v905 = vmax.f32 %v889, 0.0
        %v906 = vmax.f32 %v890, 0.0
        %v907 = vmax.f32 %v891, 0.0
        %v908 = vmax.f32 %v892, 0.0
        %v909 = vmax.f32 %v893, 0.0
        %v910 = vmax.f32 %v894, 0.0
        %v911 = vmax.f32 %v895, 0.0
        %v912 = vmax.f32 %v896, 0.0
        %913 = vmatprep.subr.mxu0 0.0
        %914 = vmatpush1.msra.mxu0 %v567
        %915 = vmatprep.subr.mxu0 0.0
        %916 = vmatpush1.msra.mxu0 %v566
        %917 = vmatprep.subr.mxu0 0.0
        %918 = vmatpush1.msra.mxu0 %v565
        %919 = vmatprep.subr.mxu0 0.0
        %920 = vmatpush1.msra.mxu0 %v564
        %921 = vmatprep.subr.mxu0 0.0
        %922 = vmatpush1.msra.mxu0 %v563
        %923 = vmatprep.subr.mxu0 0.0
        %924 = vmatpush1.msra.mxu0 %v562
        %925 = vmatprep.subr.mxu0 0.0
        %926 = vmatpush1.msra.mxu0 %v561
        %927 = vmatprep.subr.mxu0 0.0
        %928 = vmatpush1.msra.mxu0 %v560
        %929 = vmatprep.subr.mxu0 0.0
        %930 = vmatpush1.msra.mxu0 %v559
        %931 = vmatprep.subr.mxu0 0.0
        %932 = vmatpush1.msra.mxu0 %v558
        %933 = vmatprep.subr.mxu0 0.0
        %934 = vmatpush1.msra.mxu0 %v557
        %935 = vmatprep.subr.mxu0 0.0
        %936 = vmatpush1.msra.mxu0 %v556
        %937 = vmatprep.subr.mxu0 0.0
        %938 = vmatpush1.msra.mxu0 %v555
        %939 = vmatprep.subr.mxu0 0.0
        %940 = vmatpush1.msra.mxu0 %v554
        %941 = vmatprep.subr.mxu0 0.0
        %942 = vmatpush1.msra.mxu0 %v553
        %943 = vmatprep.subr.mxu0 0.0
        %944 = vmatpush1.msra.mxu0 %v552
        %945 = vmatprep.subr.mxu0 0.0
        %946 = vmatpush2.msra.mxu0 0.0
        %947 = vmatprep.subr.mxu0 0.0
        %948 = vmatpush2.msra.mxu0 0.0
        %949 = vmatprep.subr.mxu0 0.0
        %950 = vmatpush2.msra.mxu0 0.0
        %951 = vmatprep.subr.mxu0 0.0
        %952 = vmatpush2.msra.mxu0 0.0
        %953 = vmatprep.subr.mxu0 0.0
        %954 = vmatpush2.msra.mxu0 0.0
        %955 = vmatprep.subr.mxu0 0.0
        %956 = vmatpush2.msra.mxu0 0.0
        %957 = vmatprep.subr.mxu0 0.0
        %958 = vmatpush2.msra.mxu0 0.0
        %959 = vmatprep.subr.mxu0 0.0
        %960 = vmatpush2.msra.mxu0 0.0
        %961 = vmatprep.subr.mxu0 0.0
        %962 = vmatpush2.msra.mxu0 0.0
        %963 = vmatprep.subr.mxu0 0.0
        %964 = vmatpush2.msra.mxu0 0.0
        %965 = vmatprep.subr.mxu0 0.0
        %966 = vmatpush2.msra.mxu0 0.0
        %967 = vmatprep.subr.mxu0 0.0
        %968 = vmatpush2.msra.mxu0 0.0
        %969 = vmatprep.subr.mxu0 0.0
        %970 = vmatpush2.msra.mxu0 0.0
        %971 = vmatprep.subr.mxu0 0.0
        %972 = vmatpush2.msra.mxu0 0.0
        %973 = vmatprep.subr.mxu0 0.0
        %974 = vmatpush2.msra.mxu0 0.0
        %975 = vmatprep.subr.mxu0 0.0
        %976 = vmatpush2.msra.mxu0 0.0
        %977 = vmatprep.mubr.f32.mxu0 0.0
        %978 = vmatmul.mubr.f32.gmra.mxu0 %v520
        %v979 = vpop.f32.mrf.mxu0
        %v980 = vadd.f32 %v652, %v979
        %v981 = vpop.f32.mrf.mxu0
        %982 = vmatprep.mubr.f32.mxu0 0.0
        %983 = vmatmul.mubr.f32.gmra.mxu0 %v521
        %v984 = vpop.f32.mrf.mxu0
        %v985 = vadd.f32 %v657, %v984
        %v986 = vpop.f32.mrf.mxu0
        %987 = vmatprep.mubr.f32.mxu0 0.0
        %988 = vmatmul.mubr.f32.gmra.mxu0 %v522
        %v989 = vpop.f32.mrf.mxu0
        %v990 = vadd.f32 %v662, %v989
        %v991 = vpop.f32.mrf.mxu0
        %992 = vmatprep.mubr.f32.mxu0 0.0
        %993 = vmatmul.mubr.f32.gmra.mxu0 %v523
        %v994 = vpop.f32.mrf.mxu0
        %v995 = vadd.f32 %v667, %v994
        %v996 = vpop.f32.mrf.mxu0
        %997 = vmatprep.mubr.f32.mxu0 0.0
        %998 = vmatmul.mubr.f32.gmra.mxu0 %v524
        %v999 = vpop.f32.mrf.mxu0
        %v1000 = vadd.f32 %v672, %v999
        %v1001 = vpop.f32.mrf.mxu0
        %1002 = vmatprep.mubr.f32.mxu0 0.0
        %1003 = vmatmul.mubr.f32.gmra.mxu0 %v525
        %v1004 = vpop.f32.mrf.mxu0
        %v1005 = vadd.f32 %v677, %v1004
        %v1006 = vpop.f32.mrf.mxu0
        %1007 = vmatprep.mubr.f32.mxu0 0.0
        %1008 = vmatmul.mubr.f32.gmra.mxu0 %v526
        %v1009 = vpop.f32.mrf.mxu0
        %v1010 = vadd.f32 %v682, %v1009
        %v1011 = vpop.f32.mrf.mxu0
        %1012 = vmatprep.mubr.f32.mxu0 0.0
        %1013 = vmatmul.mubr.f32.gmra.mxu0 %v527
        %v1014 = vpop.f32.mrf.mxu0
        %v1015 = vadd.f32 %v687, %v1014
        %v1016 = vpop.f32.mrf.mxu0
        %1017 = vmatprep.mubr.f32.mxu0 0.0
        %1018 = vmatmul.mubr.f32.gmra.mxu0 %v528
        %v1019 = vpop.f32.mrf.mxu0
        %v1020 = vadd.f32 %v692, %v1019
        %v1021 = vpop.f32.mrf.mxu0
        %1022 = vmatprep.mubr.f32.mxu0 0.0
        %1023 = vmatmul.mubr.f32.gmra.mxu0 %v529
        %v1024 = vpop.f32.mrf.mxu0
        %v1025 = vadd.f32 %v697, %v1024
        %v1026 = vpop.f32.mrf.mxu0
        %1027 = vmatprep.mubr.f32.mxu0 0.0
        %1028 = vmatmul.mubr.f32.gmra.mxu0 %v530
        %v1029 = vpop.f32.mrf.mxu0
        %v1030 = vadd.f32 %v702, %v1029
        %v1031 = vpop.f32.mrf.mxu0
        %1032 = vmatprep.mubr.f32.mxu0 0.0
        %1033 = vmatmul.mubr.f32.gmra.mxu0 %v531
        %v1034 = vpop.f32.mrf.mxu0
        %v1035 = vadd.f32 %v707, %v1034
        %v1036 = vpop.f32.mrf.mxu0
        %1037 = vmatprep.mubr.f32.mxu0 0.0
        %1038 = vmatmul.mubr.f32.gmra.mxu0 %v532
        %v1039 = vpop.f32.mrf.mxu0
        %v1040 = vadd.f32 %v712, %v1039
        %v1041 = vpop.f32.mrf.mxu0
        %1042 = vmatprep.mubr.f32.mxu0 0.0
        %1043 = vmatmul.mubr.f32.gmra.mxu0 %v533
        %v1044 = vpop.f32.mrf.mxu0
        %v1045 = vadd.f32 %v717, %v1044
        %v1046 = vpop.f32.mrf.mxu0
        %1047 = vmatprep.mubr.f32.mxu0 0.0
        %1048 = vmatmul.mubr.f32.gmra.mxu0 %v534
        %v1049 = vpop.f32.mrf.mxu0
        %v1050 = vadd.f32 %v722, %v1049
        %v1051 = vpop.f32.mrf.mxu0
        %1052 = vmatprep.mubr.f32.mxu0 0.0
        %1053 = vmatmul.mubr.f32.gmra.mxu0 %v535
        %v1054 = vpop.f32.mrf.mxu0
        %v1055 = vadd.f32 %v727, %v1054
        %v1056 = vpop.f32.mrf.mxu0
        %1057 = vdwg.mxu0
        %v1058 = vadd.f32 %v980, %v879
        %v1059 = vadd.f32 %v985, %v879
        %v1060 = vadd.f32 %v990, %v879
        %v1061 = vadd.f32 %v995, %v879
        %v1062 = vadd.f32 %v1000, %v879
        %v1063 = vadd.f32 %v1005, %v879
        %v1064 = vadd.f32 %v1010, %v879
        %v1065 = vadd.f32 %v1015, %v879
        %v1066 = vadd.f32 %v1020, %v879
        %v1067 = vadd.f32 %v1025, %v879
        %v1068 = vadd.f32 %v1030, %v879
        %v1069 = vadd.f32 %v1035, %v879
        %v1070 = vadd.f32 %v1040, %v879
        %v1071 = vadd.f32 %v1045, %v879
        %v1072 = vadd.f32 %v1050, %v879
        %v1073 = vadd.f32 %v1055, %v879
        %v1074 = vmax.f32 %v1058, 0.0
        %v1075 = vmax.f32 %v1059, 0.0
        %v1076 = vmax.f32 %v1060, 0.0
        %v1077 = vmax.f32 %v1061, 0.0
        %v1078 = vmax.f32 %v1062, 0.0
        %v1079 = vmax.f32 %v1063, 0.0
        %v1080 = vmax.f32 %v1064, 0.0
        %v1081 = vmax.f32 %v1065, 0.0
        %v1082 = vmax.f32 %v1066, 0.0
        %v1083 = vmax.f32 %v1067, 0.0
        %v1084 = vmax.f32 %v1068, 0.0
        %v1085 = vmax.f32 %v1069, 0.0
        %v1086 = vmax.f32 %v1070, 0.0
        %v1087 = vmax.f32 %v1071, 0.0
        %v1088 = vmax.f32 %v1072, 0.0
        %v1089 = vmax.f32 %v1073, 0.0
        %v1090 = vld [vmem:[%s5] sm:$0x1]
        %s1091 = sld [smem:[#allocation4]]
        %v1092 = vstv %s1091
        %1093 = vmatprep.subr.mxu0 0.0
        %1094 = vmatpush1.xpose.msra.mxu0 %v912
        %1095 = vmatprep.subr.mxu0 0.0
        %1096 = vmatpush1.xpose.msra.mxu0 %v911
        %1097 = vmatprep.subr.mxu0 0.0
        %1098 = vmatpush1.xpose.msra.mxu0 %v910
        %1099 = vmatprep.subr.mxu0 0.0
        %1100 = vmatpush1.xpose.msra.mxu0 %v909
        %1101 = vmatprep.subr.mxu0 0.0
        %1102 = vmatpush1.xpose.msra.mxu0 %v908
        %1103 = vmatprep.subr.mxu0 0.0
        %1104 = vmatpush1.xpose.msra.mxu0 %v907
        %1105 = vmatprep.subr.mxu0 0.0
        %1106 = vmatpush1.xpose.msra.mxu0 %v906
        %1107 = vmatprep.subr.mxu0 0.0
        %1108 = vmatpush1.xpose.msra.mxu0 %v905
        %1109 = vmatprep.subr.mxu0 0.0
        %1110 = vmatpush1.xpose.msra.mxu0 %v904
        %1111 = vmatprep.subr.mxu0 0.0
        %1112 = vmatpush1.xpose.msra.mxu0 %v903
        %1113 = vmatprep.subr.mxu0 0.0
        %1114 = vmatpush1.xpose.msra.mxu0 %v902
        %1115 = vmatprep.subr.mxu0 0.0
        %1116 = vmatpush1.xpose.msra.mxu0 %v901
        %1117 = vmatprep.subr.mxu0 0.0
        %1118 = vmatpush1.xpose.msra.mxu0 %v900
        %1119 = vmatprep.subr.mxu0 0.0
        %1120 = vmatpush1.xpose.msra.mxu0 %v899
        %1121 = vmatprep.subr.mxu0 0.0
        %1122 = vmatpush1.xpose.msra.mxu0 %v898
        %1123 = vmatprep.subr.mxu0 0.0
        %1124 = vmatpush1.xpose.msra.mxu0 %v897
        %1125 = vmatprep.subr.mxu0 0.0
        %1126 = vmatpush2.xpose.msra.mxu0 0.0
        %1127 = vmatprep.subr.mxu0 0.0
        %1128 = vmatpush2.xpose.msra.mxu0 0.0
        %1129 = vmatprep.subr.mxu0 0.0
        %1130 = vmatpush2.xpose.msra.mxu0 0.0
        %1131 = vmatprep.subr.mxu0 0.0
        %1132 = vmatpush2.xpose.msra.mxu0 0.0
        %1133 = vmatprep.subr.mxu0 0.0
        %1134 = vmatpush2.xpose.msra.mxu0 0.0
        %1135 = vmatprep.subr.mxu0 0.0
        %1136 = vmatpush2.xpose.msra.mxu0 0.0
        %1137 = vmatprep.subr.mxu0 0.0
        %1138 = vmatpush2.xpose.msra.mxu0 0.0
        %1139 = vmatprep.subr.mxu0 0.0
        %1140 = vmatpush2.xpose.msra.mxu0 0.0
        %1141 = vmatprep.subr.mxu0 0.0
        %1142 = vmatpush2.xpose.msra.mxu0 0.0
        %1143 = vmatprep.subr.mxu0 0.0
        %1144 = vmatpush2.xpose.msra.mxu0 0.0
        %1145 = vmatprep.subr.mxu0 0.0
        %1146 = vmatpush2.xpose.msra.mxu0 0.0
        %1147 = vmatprep.subr.mxu0 0.0
        %1148 = vmatpush2.xpose.msra.mxu0 0.0
        %1149 = vmatprep.subr.mxu0 0.0
        %1150 = vmatpush2.xpose.msra.mxu0 0.0
        %1151 = vmatprep.subr.mxu0 0.0
        %1152 = vmatpush2.xpose.msra.mxu0 0.0
        %1153 = vmatprep.subr.mxu0 0.0
        %1154 = vmatpush2.xpose.msra.mxu0 0.0
        %1155 = vmatprep.subr.mxu0 0.0
        %1156 = vmatpush2.xpose.msra.mxu0 0.0
        %1157 = vmatprep.mubr.f32.mxu0 0.0
        %1158 = vmatmul.mubr.f32.gmra.mxu0 %v1090
        %v1159 = vpop.f32.mrf.mxu0
        %v1160 = vadd.f32 %v1092, %v1159
        %v1161 = vpop.f32.mrf.mxu0
        %1162 = vdwg.mxu0
        %1163 = vmatprep.subr.mxu0 0.0
        %1164 = vmatpush1.xpose.msra.mxu0 %v1089
        %1165 = vmatprep.subr.mxu0 0.0
        %1166 = vmatpush1.xpose.msra.mxu0 %v1088
        %1167 = vmatprep.subr.mxu0 0.0
        %1168 = vmatpush1.xpose.msra.mxu0 %v1087
        %1169 = vmatprep.subr.mxu0 0.0
        %1170 = vmatpush1.xpose.msra.mxu0 %v1086
        %1171 = vmatprep.subr.mxu0 0.0
        %1172 = vmatpush1.xpose.msra.mxu0 %v1085
        %1173 = vmatprep.subr.mxu0 0.0
        %1174 = vmatpush1.xpose.msra.mxu0 %v1084
        %1175 = vmatprep.subr.mxu0 0.0
        %1176 = vmatpush1.xpose.msra.mxu0 %v1083
        %1177 = vmatprep.subr.mxu0 0.0
        %1178 = vmatpush1.xpose.msra.mxu0 %v1082
        %1179 = vmatprep.subr.mxu0 0.0
        %1180 = vmatpush1.xpose.msra.mxu0 %v1081
        %1181 = vmatprep.subr.mxu0 0.0
        %1182 = vmatpush1.xpose.msra.mxu0 %v1080
        %1183 = vmatprep.subr.mxu0 0.0
        %1184 = vmatpush1.xpose.msra.mxu0 %v1079
        %1185 = vmatprep.subr.mxu0 0.0
        %1186 = vmatpush1.xpose.msra.mxu0 %v1078
        %1187 = vmatprep.subr.mxu0 0.0
        %1188 = vmatpush1.xpose.msra.mxu0 %v1077
        %1189 = vmatprep.subr.mxu0 0.0
        %1190 = vmatpush1.xpose.msra.mxu0 %v1076
        %1191 = vmatprep.subr.mxu0 0.0
        %1192 = vmatpush1.xpose.msra.mxu0 %v1075
        %1193 = vmatprep.subr.mxu0 0.0
        %1194 = vmatpush1.xpose.msra.mxu0 %v1074
        %1195 = vmatprep.subr.mxu0 0.0
        %1196 = vmatpush2.xpose.msra.mxu0 0.0
        %1197 = vmatprep.subr.mxu0 0.0
        %1198 = vmatpush2.xpose.msra.mxu0 0.0
        %1199 = vmatprep.subr.mxu0 0.0
        %1200 = vmatpush2.xpose.msra.mxu0 0.0
        %1201 = vmatprep.subr.mxu0 0.0
        %1202 = vmatpush2.xpose.msra.mxu0 0.0
        %1203 = vmatprep.subr.mxu0 0.0
        %1204 = vmatpush2.xpose.msra.mxu0 0.0
        %1205 = vmatprep.subr.mxu0 0.0
        %1206 = vmatpush2.xpose.msra.mxu0 0.0
        %1207 = vmatprep.subr.mxu0 0.0
        %1208 = vmatpush2.xpose.msra.mxu0 0.0
        %1209 = vmatprep.subr.mxu0 0.0
        %1210 = vmatpush2.xpose.msra.mxu0 0.0
        %1211 = vmatprep.subr.mxu0 0.0
        %1212 = vmatpush2.xpose.msra.mxu0 0.0
        %1213 = vmatprep.subr.mxu0 0.0
        %1214 = vmatpush2.xpose.msra.mxu0 0.0
        %1215 = vmatprep.subr.mxu0 0.0
        %1216 = vmatpush2.xpose.msra.mxu0 0.0
        %1217 = vmatprep.subr.mxu0 0.0
        %1218 = vmatpush2.xpose.msra.mxu0 0.0
        %1219 = vmatprep.subr.mxu0 0.0
        %1220 = vmatpush2.xpose.msra.mxu0 0.0
        %1221 = vmatprep.subr.mxu0 0.0
        %1222 = vmatpush2.xpose.msra.mxu0 0.0
        %1223 = vmatprep.subr.mxu0 0.0
        %1224 = vmatpush2.xpose.msra.mxu0 0.0
        %1225 = vmatprep.subr.mxu0 0.0
        %1226 = vmatpush2.xpose.msra.mxu0 0.0
        %1227 = vmatprep.mubr.f32.mxu0 0.0
        %1228 = vmatmul.mubr.f32.gmra.mxu0 %v1090
        %v1229 = vpop.f32.mrf.mxu0
        %v1230 = vadd.f32 %v1092, %v1229
        %v1231 = vpop.f32.mrf.mxu0
        %1232 = vdwg.mxu0
        %v1233 = vxor.u32 %v1160, 2147483648
        %v1234 = vmul.f32 %v1233, 1.442695
        %v1235 = vpow.pop %v1234
        %v1236 = vadd.f32 %v1235, 1.0
        %v1237 = vrcp.pop %v1236
        %v1238 = vmul.f32 1.0, %v1237
        %v1239 = vxor.u32 %v1230, 2147483648
        %v1240 = vmul.f32 %v1239, 1.442695
        %v1241 = vpow.pop %v1240
        %v1242 = vadd.f32 %v1241, 1.0
        %v1243 = vrcp.pop %v1242
        %v1244 = vmul.f32 1.0, %v1243
        %1245 = vst [vmem:[%s477] sm:$0x1] %v1238
        %1246 = vst [vmem:[%s483] sm:$0x1] %v1244
        %v1247 = vld [vmem:[#allocation2] sm:$0x1]
        %1248 = vmatprep.subr.mxu0 0.0
        %1249 = vmatpush1.msra.mxu0 %v519
        %1250 = vmatprep.subr.mxu0 0.0
        %1251 = vmatpush1.msra.mxu0 %v518
        %1252 = vmatprep.subr.mxu0 0.0
        %1253 = vmatpush1.msra.mxu0 %v517
        %1254 = vmatprep.subr.mxu0 0.0
        %1255 = vmatpush1.msra.mxu0 %v516
        %1256 = vmatprep.subr.mxu0 0.0
        %1257 = vmatpush1.msra.mxu0 %v515
        %1258 = vmatprep.subr.mxu0 0.0
        %1259 = vmatpush1.msra.mxu0 %v514
        %1260 = vmatprep.subr.mxu0 0.0
        %1261 = vmatpush1.msra.mxu0 %v513
        %1262 = vmatprep.subr.mxu0 0.0
        %1263 = vmatpush1.msra.mxu0 %v512
        %1264 = vmatprep.subr.mxu0 0.0
        %1265 = vmatpush1.msra.mxu0 %v511
        %1266 = vmatprep.subr.mxu0 0.0
        %1267 = vmatpush1.msra.mxu0 %v510
        %1268 = vmatprep.subr.mxu0 0.0
        %1269 = vmatpush1.msra.mxu0 %v509
        %1270 = vmatprep.subr.mxu0 0.0
        %1271 = vmatpush1.msra.mxu0 %v508
        %1272 = vmatprep.subr.mxu0 0.0
        %1273 = vmatpush1.msra.mxu0 %v507
        %1274 = vmatprep.subr.mxu0 0.0
        %1275 = vmatpush1.msra.mxu0 %v506
        %1276 = vmatprep.subr.mxu0 0.0
        %1277 = vmatpush1.msra.mxu0 %v505
        %1278 = vmatprep.subr.mxu0 0.0
        %1279 = vmatpush1.msra.mxu0 %v504
        %1280 = vmatprep.subr.mxu0 0.0
        %1281 = vmatpush2.msra.mxu0 0.0
        %1282 = vmatprep.subr.mxu0 0.0
        %1283 = vmatpush2.msra.mxu0 0.0
        %1284 = vmatprep.subr.mxu0 0.0
        %1285 = vmatpush2.msra.mxu0 0.0
        %1286 = vmatprep.subr.mxu0 0.0
        %1287 = vmatpush2.msra.mxu0 0.0
        %1288 = vmatprep.subr.mxu0 0.0
        %1289 = vmatpush2.msra.mxu0 0.0
        %1290 = vmatprep.subr.mxu0 0.0
        %1291 = vmatpush2.msra.mxu0 0.0
        %1292 = vmatprep.subr.mxu0 0.0
        %1293 = vmatpush2.msra.mxu0 0.0
        %1294 = vmatprep.subr.mxu0 0.0
        %1295 = vmatpush2.msra.mxu0 0.0
        %1296 = vmatprep.subr.mxu0 0.0
        %1297 = vmatpush2.msra.mxu0 0.0
        %1298 = vmatprep.subr.mxu0 0.0
        %1299 = vmatpush2.msra.mxu0 0.0
        %1300 = vmatprep.subr.mxu0 0.0
        %1301 = vmatpush2.msra.mxu0 0.0
        %1302 = vmatprep.subr.mxu0 0.0
        %1303 = vmatpush2.msra.mxu0 0.0
        %1304 = vmatprep.subr.mxu0 0.0
        %1305 = vmatpush2.msra.mxu0 0.0
        %1306 = vmatprep.subr.mxu0 0.0
        %1307 = vmatpush2.msra.mxu0 0.0
        %1308 = vmatprep.subr.mxu0 0.0
        %1309 = vmatpush2.msra.mxu0 0.0
        %1310 = vmatprep.subr.mxu0 0.0
        %1311 = vmatpush2.msra.mxu0 0.0
        %1312 = vmatprep.mubr.f32.mxu0 0.0
        %1313 = vmatmul.mubr.f32.gmra.mxu0 %v1238
        %v1314 = vpop.f32.mrf.mxu0
        %v1315 = vadd.f32 0.0, %v1314
        %v1316 = vpop.f32.mrf.mxu0
        %1317 = vdwg.mxu0
        %v1318 = vadd.f32 %v1247, %v1315
        %1319 = vst [vmem:[#allocation2] sm:$0x1] %v1318
        %v1320 = vld [vmem:[#allocation3] sm:$0x1]
        %1321 = vmatprep.subr.mxu0 0.0
        %1322 = vmatpush1.msra.mxu0 %v535
        %1323 = vmatprep.subr.mxu0 0.0
        %1324 = vmatpush1.msra.mxu0 %v534
        %1325 = vmatprep.subr.mxu0 0.0
        %1326 = vmatpush1.msra.mxu0 %v533
        %1327 = vmatprep.subr.mxu0 0.0
        %1328 = vmatpush1.msra.mxu0 %v532
        %1329 = vmatprep.subr.mxu0 0.0
        %1330 = vmatpush1.msra.mxu0 %v531
        %1331 = vmatprep.subr.mxu0 0.0
        %1332 = vmatpush1.msra.mxu0 %v530
        %1333 = vmatprep.subr.mxu0 0.0
        %1334 = vmatpush1.msra.mxu0 %v529
        %1335 = vmatprep.subr.mxu0 0.0
        %1336 = vmatpush1.msra.mxu0 %v528
        %1337 = vmatprep.subr.mxu0 0.0
        %1338 = vmatpush1.msra.mxu0 %v527
        %1339 = vmatprep.subr.mxu0 0.0
        %1340 = vmatpush1.msra.mxu0 %v526
        %1341 = vmatprep.subr.mxu0 0.0
        %1342 = vmatpush1.msra.mxu0 %v525
        %1343 = vmatprep.subr.mxu0 0.0
        %1344 = vmatpush1.msra.mxu0 %v524
        %1345 = vmatprep.subr.mxu0 0.0
        %1346 = vmatpush1.msra.mxu0 %v523
        %1347 = vmatprep.subr.mxu0 0.0
        %1348 = vmatpush1.msra.mxu0 %v522
        %1349 = vmatprep.subr.mxu0 0.0
        %1350 = vmatpush1.msra.mxu0 %v521
        %1351 = vmatprep.subr.mxu0 0.0
        %1352 = vmatpush1.msra.mxu0 %v520
        %1353 = vmatprep.subr.mxu0 0.0
        %1354 = vmatpush2.msra.mxu0 0.0
        %1355 = vmatprep.subr.mxu0 0.0
        %1356 = vmatpush2.msra.mxu0 0.0
        %1357 = vmatprep.subr.mxu0 0.0
        %1358 = vmatpush2.msra.mxu0 0.0
        %1359 = vmatprep.subr.mxu0 0.0
        %1360 = vmatpush2.msra.mxu0 0.0
        %1361 = vmatprep.subr.mxu0 0.0
        %1362 = vmatpush2.msra.mxu0 0.0
        %1363 = vmatprep.subr.mxu0 0.0
        %1364 = vmatpush2.msra.mxu0 0.0
        %1365 = vmatprep.subr.mxu0 0.0
        %1366 = vmatpush2.msra.mxu0 0.0
        %1367 = vmatprep.subr.mxu0 0.0
        %1368 = vmatpush2.msra.mxu0 0.0
        %1369 = vmatprep.subr.mxu0 0.0
        %1370 = vmatpush2.msra.mxu0 0.0
        %1371 = vmatprep.subr.mxu0 0.0
        %1372 = vmatpush2.msra.mxu0 0.0
        %1373 = vmatprep.subr.mxu0 0.0
        %1374 = vmatpush2.msra.mxu0 0.0
        %1375 = vmatprep.subr.mxu0 0.0
        %1376 = vmatpush2.msra.mxu0 0.0
        %1377 = vmatprep.subr.mxu0 0.0
        %1378 = vmatpush2.msra.mxu0 0.0
        %1379 = vmatprep.subr.mxu0 0.0
        %1380 = vmatpush2.msra.mxu0 0.0
        %1381 = vmatprep.subr.mxu0 0.0
        %1382 = vmatpush2.msra.mxu0 0.0
        %1383 = vmatprep.subr.mxu0 0.0
        %1384 = vmatpush2.msra.mxu0 0.0
        %1385 = vmatprep.mubr.f32.mxu0 0.0
        %1386 = vmatmul.mubr.f32.gmra.mxu0 %v1244
        %v1387 = vpop.f32.mrf.mxu0
        %v1388 = vadd.f32 0.0, %v1387
        %v1389 = vpop.f32.mrf.mxu0
        %1390 = vdwg.mxu0
        %v1391 = vadd.f32 %v1320, %v1388
        %1392 = vst [vmem:[#allocation3] sm:$0x1] %v1391
        %p1393 = scmp.eq.s32.totalorder %s44, 1
        // Predicated region
        $region69: #{tpu_custom_call.1} parent=47 // pred_check
          %p1394 = pneg %p1393
        $region70: #{tpu_custom_call.1} parent=47 // pred_check_branch
          %1396 = sbr.rel (%p1394) target = $region72
        $region71: #{tpu_custom_call.1} parent=47 // pred_region
          %v1397 = vld [vmem:[#allocation2] sm:$0x1]
          %1398 = vst [vmem:[%s489] sm:$0x1] %v1397
          %v1399 = vld [vmem:[#allocation3] sm:$0x1]
          %1400 = vst [vmem:[%s495] sm:$0x1] %v1399
        $region72: #{tpu_custom_call.1} parent=47 // pred_fallthru
          _
        %s1401 = sand.u32 %s222, 1
        %s1402 = scalar_lea.sflag [#allocation7], %s1401
        %s1403 = sand.u32 %s222, 1
        %s1404 = scalar_lea.vmem [#allocation13], %s1403
        %s1405 = sand.u32 %s39, 1
        %s1406 = scalar_lea.sflag [#allocation15], %s1405
        %s1407 = sand.u32 %s250, 1
        %s1408 = scalar_lea.vmem [#allocation14], %s1407
        %s1409 = sand.u32 %s39, 1
        %s1410 = scalar_lea.sflag [#allocation15], %s1409
        %s1411 = sand.u32 %s276, 1
        %s1412 = scalar_lea.vmem [#allocation16], %s1411
        %s1413 = sand.u32 %s302, 1
        %s1414 = scalar_lea.sflag [#allocation18], %s1413
        %s1415 = sand.u32 %s302, 1
        %s1416 = scalar_lea.vmem [#allocation17], %s1415
        // Predicated region
        $region73: #{tpu_custom_call.1} parent=47 // pred_check
          %p1417 = pneg %p232
        $region74: #{tpu_custom_call.1} parent=47 // pred_check_branch
          %1419 = sbr.rel (%p1417) target = $region76
        $region75: #{tpu_custom_call.1} parent=47 // pred_region
          %s1421 = ssub.s32 16, 16
          %1422 = vsyncadd %s1402, %s1421
          %s1423 = smul.addr %s43, 2
          %s1424 = sadd.s32 %s44, %s1423
          %s1425 = smul.addr %s1424, 16
          %s1426 = scalar_lea.hbm %s7, %s1425
          %s1428 = sshll.u32 %s1404, 4
          %s1429 = int_to_ptr.vmem [resolvable:$true] %s1428
          %1431 = dma.vmem_to_hbm [thread:$0]  %s1429, 16, %s1426, %s1402
        $region76: #{tpu_custom_call.1} parent=47 // pred_fallthru
          _
        // Predicated region
        $region77: #{tpu_custom_call.1} parent=47 // pred_check
          %p1432 = pneg %p260
        $region78: #{tpu_custom_call.1} parent=47 // pred_check_branch
          %1434 = sbr.rel (%p1432) target = $region80
        $region79: #{tpu_custom_call.1} parent=47 // pred_region
          %s1436 = ssub.s32 16, 16
          %1437 = vsyncadd %s1406, %s1436
          %s1438 = smul.addr %s43, 2
          %s1439 = sadd.s32 %s44, %s1438
          %s1440 = smul.addr %s1439, 16
          %s1441 = scalar_lea.hbm %s8, %s1440
          %s1443 = sshll.u32 %s1408, 4
          %s1444 = int_to_ptr.vmem [resolvable:$true] %s1443
          %1446 = dma.vmem_to_hbm [thread:$0]  %s1444, 16, %s1441, %s1406
        $region80: #{tpu_custom_call.1} parent=47 // pred_fallthru
          _
        // Predicated region
        $region81: #{tpu_custom_call.1} parent=47 // pred_check
          %p1447 = pneg %p286
        $region82: #{tpu_custom_call.1} parent=47 // pred_check_branch
          %1449 = sbr.rel (%p1447) target = $region84
        $region83: #{tpu_custom_call.1} parent=47 // pred_region
          %s1451 = ssub.s32 16, 16
          %1452 = vsyncadd %s1410, %s1451
          %s1453 = smul.addr %s43, 16
          %s1454 = scalar_lea.hbm %s9, %s1453
          %s1456 = sshll.u32 %s1412, 4
          %s1457 = int_to_ptr.vmem [resolvable:$true] %s1456
          %1459 = dma.vmem_to_hbm [thread:$0]  %s1457, 16, %s1454, %s1410
        $region84: #{tpu_custom_call.1} parent=47 // pred_fallthru
          _
        // Predicated region
        $region85: #{tpu_custom_call.1} parent=47 // pred_check
          %p1460 = pneg %p312
        $region86: #{tpu_custom_call.1} parent=47 // pred_check_branch
          %1462 = sbr.rel (%p1460) target = $region88
        $region87: #{tpu_custom_call.1} parent=47 // pred_region
          %s1464 = ssub.s32 16, 16
          %1465 = vsyncadd %s1414, %s1464
          %s1466 = smul.addr %s43, 16
          %s1467 = scalar_lea.hbm %s10, %s1466
          %s1469 = sshll.u32 %s1416, 4
          %s1470 = int_to_ptr.vmem [resolvable:$true] %s1469
          %1472 = dma.vmem_to_hbm [thread:$0]  %s1470, 16, %s1467, %s1414
        $region88: #{tpu_custom_call.1} parent=47 // pred_fallthru
          _
      $region48: #{tpu_custom_call.1} parent=5 // pred_fallthru
        _
      %p1473 = scmp.le.s32.totalorder 2, %s34
      // Predicated region
      $region89: #{tpu_custom_call.1} parent=5 // pred_check
        %p1474 = pneg %p1473
      $region90: #{tpu_custom_call.1} parent=5 // pred_check_branch
        %1476 = sbr.rel (%p1474) target = $region92
      $region91: #{tpu_custom_call.1} parent=5 // pred_region
        %s1477 = ssub.s32 %s34, 2
        // Predicated region
        $region93: #{tpu_custom_call.1} parent=91 // pred_check
          %p1478 = pneg %p238
        $region94: #{tpu_custom_call.1} parent=91 // pred_check_branch
          %1480 = sbr.rel (%p1478) target = $region96
        $region95: #{tpu_custom_call.1} parent=91 // pred_region
          %s1481 = sand.u32 %s223, 1
          %s1482 = scalar_lea.sflag [#allocation7], %s1481
          %s1483 = sand.u32 %s223, 1
          %s1484 = scalar_lea.vmem [#allocation13], %s1483
          %1485 = dma.done %s1482, 16
        $region96: #{tpu_custom_call.1} parent=91 // pred_fallthru
          _
        // Predicated region
        $region97: #{tpu_custom_call.1} parent=91 // pred_check
          %p1486 = pneg %p266
        $region98: #{tpu_custom_call.1} parent=91 // pred_check_branch
          %1488 = sbr.rel (%p1486) target = $region100
        $region99: #{tpu_custom_call.1} parent=91 // pred_region
          %s1489 = sand.u32 %s40, 1
          %s1490 = scalar_lea.sflag [#allocation15], %s1489
          %s1491 = sand.u32 %s251, 1
          %s1492 = scalar_lea.vmem [#allocation14], %s1491
          %1493 = dma.done %s1490, 16
        $region100: #{tpu_custom_call.1} parent=91 // pred_fallthru
          _
        // Predicated region
        $region101: #{tpu_custom_call.1} parent=91 // pred_check
          %p1494 = pneg %p292
        $region102: #{tpu_custom_call.1} parent=91 // pred_check_branch
          %1496 = sbr.rel (%p1494) target = $region104
        $region103: #{tpu_custom_call.1} parent=91 // pred_region
          %s1497 = sand.u32 %s40, 1
          %s1498 = scalar_lea.sflag [#allocation15], %s1497
          %s1499 = sand.u32 %s277, 1
          %s1500 = scalar_lea.vmem [#allocation16], %s1499
          %1501 = dma.done %s1498, 16
        $region104: #{tpu_custom_call.1} parent=91 // pred_fallthru
          _
        // Predicated region
        $region105: #{tpu_custom_call.1} parent=91 // pred_check
          %p1502 = pneg %p318
        $region106: #{tpu_custom_call.1} parent=91 // pred_check_branch
          %1504 = sbr.rel (%p1502) target = $region108
        $region107: #{tpu_custom_call.1} parent=91 // pred_region
          %s1505 = sand.u32 %s303, 1
          %s1506 = scalar_lea.sflag [#allocation18], %s1505
          %s1507 = sand.u32 %s303, 1
          %s1508 = scalar_lea.vmem [#allocation17], %s1507
          %1509 = dma.done %s1506, 16
        $region108: #{tpu_custom_call.1} parent=91 // pred_fallthru
          _
      $region92: #{tpu_custom_call.1} parent=5 // pred_fallthru
        _
    $region6: #{tpu_custom_call.1} parent=1 // loop_footer
      %s38 = sadd.s32 1, %s34
    $region7: #{tpu_custom_call.1} parent=1 // loop_footer_branch
      %33 = sbr.rel target = $region3
    $region8: #{tpu_custom_call.1} parent=1 // loop_exit
      _
    %1510 = vsyncpa [#allocation6], 1
    %s1511 = scalar_lea.sflag [#allocation6], 1
    %1512 = vsyncpa %s1511, 1
    %1513 = vsyncpa [#allocation9], 1
    %s1514 = scalar_lea.sflag [#allocation9], 1
    %1515 = vsyncpa %s1514, 1
    %1516 = vsyncpa [#allocation12], 1
    %1517 = vsyncpa [#allocation7], 1
    %s1518 = scalar_lea.sflag [#allocation7], 1
    %1519 = vsyncpa %s1518, 1
    %1520 = vsyncpa [#allocation15], 1
    %s1521 = scalar_lea.sflag [#allocation15], 1
    %1522 = vsyncpa %s1521, 1
    %1523 = vsyncpa [#allocation18], 1
    %s1524 = scalar_lea.sflag [#allocation18], 1
    %1525 = vsyncpa %s1524, 1

</llo_original>
